<compile_context>
chip_gen: v6e
topology: v6e:2x2x1
jax: 0.10.0
libtpu: 0.0.40
codegen_flags: <defaults>
</compile_context>

<pallas_src>
import jax
import jax.numpy as jnp
import numpy as np
from jax.experimental import pallas as pl
from jax.experimental.pallas import tpu as pltpu


# ----------------------------------------------------------------------------
# Pure-JAX reference (transliteration of the PyTorch forward).
# ----------------------------------------------------------------------------
def dwt_reference(x):
    x01 = x[:, :, 0::2, :] / 2
    x02 = x[:, :, 1::2, :] / 2
    x1 = x01[:, :, :, 0::2]
    x2 = x02[:, :, :, 0::2]
    x3 = x01[:, :, :, 1::2]
    x4 = x02[:, :, :, 1::2]
    xll = x1 + x2 + x3 + x4
    xlh = -x1 + x2 - x3 + x4
    xhl = -x1 - x2 + x3 + x4
    xhh = x1 - x2 - x3 + x4
    return xll, xlh, xhl, xhh          # PyTorch return order


# ----------------------------------------------------------------------------
# Hardware-aware budgets & tile choosers.
# ----------------------------------------------------------------------------
def _hw_budget(itemsize):
    cap = 128 << 20
    try:
        info = pltpu.get_tpu_info()
        cap = int(getattr(info, "vmem_capacity_bytes", cap) or cap)
    except Exception:
        pass
    small_vmem = cap <= (80 << 20)      # v7x-like: 64 MiB VMEM, 2 TCs/chip
    if small_vmem:
        return dict(fused_block=3 << 20, poly_block=4 << 20,
                    vmem_cap=48 << 20, prefer_steps=8)
    # v5e/v6e: 128 MiB VMEM, single TensorCore -> big blocks, no forced split.
    return dict(fused_block=6 << 20, poly_block=8 << 20,
                vmem_cap=88 << 20, prefer_steps=1)


def _divisors(n):
    return [d for d in range(1, n + 1) if n % d == 0]


def _sublane_multiple(itemsize):
    # (8,128) tile for 32-bit; sub-32-bit dtypes pack along sublanes.
    return max(8, 32 // itemsize)


def _choose_tiles_fused(BC, H2, W, itemsize, budget_bytes, prefer_steps):
    sub = _sublane_multiple(itemsize)
    row_bytes = 2 * W * itemsize                       # one (h2) row-pair
    h2_cands = [h for h in _divisors(H2) if h % sub == 0 or h == H2]
    bc_cands = _divisors(BC)

    def data_bytes(t):
        return t[0] * t[1] * row_bytes

    fits = [(b, h) for h in h2_cands for b in bc_cands
            if data_bytes((b, h)) <= budget_bytes]
    if fits:
        best = max(fits, key=lambda t: (data_bytes(t), t[1] == H2, t[1], t[0]))
    else:
        best = (1, min(h2_cands))
    if prefer_steps > 1:
        def steps(t):
            return (BC // t[0]) * (H2 // t[1])
        if steps(best) < prefer_steps:
            alts = [t for t in fits
                    if steps(t) >= prefer_steps and steps(t) % 2 == 0
                    and data_bytes(t) >= min(budget_bytes // 4, 1 << 19)]
            if alts:
                best = max(alts, key=data_bytes)
    return best


def _choose_tiles_poly(BC, HW2, itemsize, budget_bytes, prefer_steps):
    sub = _sublane_multiple(itemsize)
    tb_cands = [d for d in _divisors(BC) if d % sub == 0 or d == BC]
    hw_cands = [d for d in _divisors(HW2) if d % 128 == 0 or d == HW2]

    def data_bytes(t):
        return 4 * t[0] * t[1] * itemsize

    fits = [(t, w) for t in tb_cands for w in hw_cands
            if data_bytes((t, w)) <= budget_bytes]
    if fits:
        best = max(fits, key=lambda t: (data_bytes(t), t[1], t[0]))
    else:
        best = (min(tb_cands), min(hw_cands))
    if prefer_steps > 1:
        def steps(t):
            return (BC // t[0]) * (HW2 // t[1])
        if steps(best) < prefer_steps:
            alts = [t for t in fits
                    if steps(t) >= prefer_steps and steps(t) % 2 == 0
                    and data_bytes(t) >= min(budget_bytes // 4, 1 << 19)]
            if alts:
                best = max(alts, key=data_bytes)
    return best


# ----------------------------------------------------------------------------
# In-kernel column (lane) de-interleave strategies.
# ----------------------------------------------------------------------------
def _col_split_strided_factory(ab_shape):
    """Lane-strided slices; cheapest if Mosaic lowers strided slices."""
    del ab_shape

    def split(c):
        return c[..., 0::2], c[..., 1::2]

    return split


def _col_split_rollnet_factory(ab_shape):
    """Unriffle via log2(W)-1 stages of pltpu.roll + select (power-of-2 W).

    The permutation new[j] = old[j with index bits (t, t+1) swapped] is applied
    for t = 0 .. k-2, which bit-rotates the index so that even columns land in
    lanes [0, W2) and odd columns in [W2, W).  Masks are built once and reused
    for both row-parity arrays.  Everything runs on idle XLU/VPU slots.
    """
    W = ab_shape[-1]
    assert W >= 2 and (W & (W - 1)) == 0
    W2 = W // 2
    nbits = W.bit_length() - 1
    lane_axis = len(ab_shape) - 1
    iota = jax.lax.broadcasted_iota(jnp.int32, ab_shape, lane_axis)
    stages = []
    for t in range(nbits - 1):
        d = 1 << t
        bit_t = (iota >> t) & 1
        bit_t1 = (iota >> (t + 1)) & 1
        take_hi = jnp.logical_and(bit_t == 1, bit_t1 == 0)   # read old[j + d]
        take_lo = jnp.logical_and(bit_t == 0, bit_t1 == 1)   # read old[j - d]
        stages.append((d, take_hi, take_lo))

    def split(c):
        y = c
        for d, hi, lo in stages:
            y_hi = pltpu.roll(y, W - d, axis=lane_axis)   # y_hi[j] = y[j + d]
            y_lo = pltpu.roll(y, d, axis=lane_axis)       # y_lo[j] = y[j - d]
            y = jnp.where(hi, y_hi, jnp.where(lo, y_lo, y))
        evens = y[..., :W2]
        odds = pltpu.roll(y, W2, axis=lane_axis)[..., :W2]
        return evens, odds

    return split


# ----------------------------------------------------------------------------
# Fused (single HBM pass) kernel.
# ----------------------------------------------------------------------------
def _make_fused_kernel(split_factory, ab_shape):
    def kernel(x_ref, ll_ref, lh_ref, hl_ref, hh_ref):
        # x_ref block: (tb, h2b, 2, W); dim 2 = image-row parity (free reshape).
        split = split_factory(ab_shape)
        a = x_ref[:, :, 0, :]            # even rows   (tb, h2b, W)
        b = x_ref[:, :, 1, :]            # odd rows
        x1, x3 = split(a)                # even cols, odd cols of even rows
        x2, x4 = split(b)                # even cols, odd cols of odd rows
        # Butterfly (4 mul + 8 add per element), scale by 1/2 at the end.
        s = x1 + x2
        t = x3 + x4
        u = x2 - x1
        v = x4 - x3
        ll_ref[...] = ((s + t) * 0.5).astype(ll_ref.dtype)   # xll
        lh_ref[...] = ((u + v) * 0.5).astype(lh_ref.dtype)   # xlh
        hl_ref[...] = ((t - s) * 0.5).astype(hl_ref.dtype)   # xhl
        hh_ref[...] = ((v - u) * 0.5).astype(hh_ref.dtype)   # xhh

    return kernel


def _build_fused(shape, dtype, split_factory):
    B, C, H, W = shape
    H2, W2, BC = H // 2, W // 2, B * C
    itemsize = jnp.dtype(dtype).itemsize
    cfg = _hw_budget(itemsize)
    tb, h2b = _choose_tiles_fused(BC, H2, W, itemsize,
                                  cfg["fused_block"], cfg["prefer_steps"])
    grid = (BC // tb, H2 // h2b)
    block_data = tb * h2b * 2 * W * itemsize
    # Input buffers are sublane-padded (2 -> 8) => ~4x, plus 4 outputs, x2 for
    # double buffering, plus in-kernel intermediates: ~12x raw block data.
    vmem_limit = int(min(max(12 * block_data + (16 << 20), 32 << 20),
                         cfg["vmem_cap"]))

    ab_shape = (tb, h2b, W)
    kernel = _make_fused_kernel(split_factory, ab_shape)

    out_sds = jax.ShapeDtypeStruct((BC, H2, W2), dtype)
    out_spec = pl.BlockSpec((tb, h2b, W2), lambda i, j: (i, j, 0))
    call = pl.pallas_call(
        kernel,
        out_shape=(out_sds,) * 4,
        grid=grid,
        in_specs=[pl.BlockSpec((tb, h2b, 2, W), lambda i, j: (i, j, 0, 0))],
        out_specs=(out_spec,) * 4,
        compiler_params=pltpu.CompilerParams(
            dimension_semantics=("parallel", "parallel"),
            vmem_limit_bytes=vmem_limit,
        ),
    )

    @jax.jit
    def run(x):
        xv = x.reshape(BC, H2, 2, W)     # free reshape: row parity -> dim 2
        ll, lh, hl, hh = call(xv)
        rs = lambda o: o.reshape(B, C, H2, W2)
        return rs(ll), rs(lh), rs(hl), rs(hh)

    return run


# ----------------------------------------------------------------------------
# Fallback: polyphase planes built in the wrapper (always lowers).
# ----------------------------------------------------------------------------
def _build_polyphase(shape, dtype):
    B, C, H, W = shape
    H2, W2, BC = H // 2, W // 2, B * C
    HW2 = H2 * W2
    itemsize = jnp.dtype(dtype).itemsize
    cfg = _hw_budget(itemsize)
    tb, hw2b = _choose_tiles_poly(BC, HW2, itemsize,
                                  cfg["poly_block"], cfg["prefer_steps"])
    grid = (BC // tb, HW2 // hw2b)
    block_data = 4 * tb * hw2b * itemsize
    vmem_limit = int(min(max(6 * block_data + (16 << 20), 32 << 20),
                         cfg["vmem_cap"]))

    def kernel(x_ref, ll_ref, lh_ref, hl_ref, hh_ref):
        # planes: 0=(even row,even col) 1=(odd row,even col)
        #         2=(even row,odd col)  3=(odd row,odd col)
        x1 = x_ref[0]
        x2 = x_ref[1]
        x3 = x_ref[2]
        x4 = x_ref[3]
        s = x1 + x2
        t = x3 + x4
        u = x2 - x1
        v = x4 - x3
        ll_ref[...] = ((s + t) * 0.5).astype(ll_ref.dtype)   # xll
        lh_ref[...] = ((u + v) * 0.5).astype(lh_ref.dtype)   # xlh
        hl_ref[...] = ((t - s) * 0.5).astype(hl_ref.dtype)   # xhl
        hh_ref[...] = ((v - u) * 0.5).astype(hh_ref.dtype)   # xhh

    out_sds = jax.ShapeDtypeStruct((BC, HW2), dtype)
    out_spec = pl.BlockSpec((tb, hw2b), lambda i, j: (i, j))
    call = pl.pallas_call(
        kernel,
        out_shape=(out_sds,) * 4,
        grid=grid,
        in_specs=[pl.BlockSpec((4, tb, hw2b), lambda i, j: (0, i, j))],
        out_specs=(out_spec,) * 4,
        compiler_params=pltpu.CompilerParams(
            dimension_semantics=("parallel", "parallel"),
            allow_input_fusion=[True],
            vmem_limit_bytes=vmem_limit,
        ),
    )

    @jax.jit
    def run(x):
        # Polyphase split as XLA glue (may materialize one extra HBM pass).
        xr = x.reshape(BC, H2, 2, W2, 2)            # [bc, h2, rpar, w2, cpar]
        xp = jnp.transpose(xr, (4, 2, 0, 1, 3)).reshape(4, BC, HW2)
        ll, lh, hl, hh = call(xp)
        rs = lambda o: o.reshape(B, C, H2, W2)
        return rs(ll), rs(lh), rs(hl), rs(hh)

    return run


# ----------------------------------------------------------------------------
# Dispatch: probe fused variants once per (shape, dtype), verify, fall back.
# ----------------------------------------------------------------------------
_IMPL_CACHE = {}


def _is_tracer(x):
    try:
        return isinstance(x, jax.core.Tracer)
    except Exception:
        return False


def _select_impl(x):
    shape = tuple(int(d) for d in x.shape)
    dtype = jnp.dtype(x.dtype)
    _, _, _, W = shape

    candidates = [_build_fused(shape, dtype, _col_split_strided_factory)]
    if W >= 2 and (W & (W - 1)) == 0:
        candidates.append(_build_fused(shape, dtype, _col_split_rollnet_factory))
    safe = _build_polyphase(shape, dtype)

    if _is_tracer(x):
        return safe                     # can't probe under tracing; stay safe

    tol = 1e-5 if dtype in (jnp.float32, jnp.float64) else 2e-2
    refs = None
    for impl in candidates:
        try:
            outs = jax.block_until_ready(impl(x))
            if refs is None:
                refs = jax.block_until_ready(dwt_reference(x))
            ok = all(np.allclose(np.asarray(o), np.asarray(r),
                                 rtol=tol, atol=tol)
                     for o, r in zip(outs, refs))
            if ok:
                return impl
        except Exception:
            continue
    return safe


def dwt(x):
    """Forward of the PyTorch DWT module; returns (xll, xlh, xhl, xhh)."""
    assert x.ndim == 4, "expected NCHW input"
    _, _, H, W = x.shape
    assert H % 2 == 0 and W % 2 == 0, "DWT requires even spatial dimensions"
    key = (tuple(int(d) for d in x.shape), str(jnp.dtype(x.dtype)))
    impl = _IMPL_CACHE.get(key)
    if impl is None:
        impl = _select_impl(x)
        _IMPL_CACHE[key] = impl
    return impl(x)


if __name__ == "__main__":
    key = jax.random.PRNGKey(0)
    x = jax.random.normal(key, (2, 4, 16, 16), dtype=jnp.float32)

    outs = jax.block_until_ready(dwt(x))
    refs = dwt_reference(x)
    assert len(outs) == 4
    for o, r in zip(outs, refs):
        assert o.shape == r.shape and o.dtype == r.dtype
        np.testing.assert_allclose(np.asarray(o), np.asarray(r),
                                   rtol=1e-5, atol=1e-5)

    print("KERNEL_OK")
</pallas_src>

<mosaic_0001>
module attributes {stable_mosaic.version = 11 : i64} {
  func.func @kernel(%arg0: i32, %arg1: i32, %arg2: memref<8x8x2x16xf32, #tpu.memory_space<vmem>>, %arg3: memref<8x8x8xf32, #tpu.memory_space<vmem>>, %arg4: memref<8x8x8xf32, #tpu.memory_space<vmem>>, %arg5: memref<8x8x8xf32, #tpu.memory_space<vmem>>, %arg6: memref<8x8x8xf32, #tpu.memory_space<vmem>>) attributes {dimension_semantics = [#tpu.dimension_semantics<parallel>, #tpu.dimension_semantics<parallel>], iteration_bounds = array<i64: 1, 1>, scalar_prefetch = 0 : i64, scratch_operands = 0 : i64, tpu.core_type = #tpu.core_type<tc>, window_params = [{transform_indices = @transform_0, window_bounds = array<i64: 8, 8, 2, 16>}, {transform_indices = @transform_1, window_bounds = array<i64: 8, 8, 8>}, {transform_indices = @transform_2, window_bounds = array<i64: 8, 8, 8>}, {transform_indices = @transform_3, window_bounds = array<i64: 8, 8, 8>}, {transform_indices = @transform_4, window_bounds = array<i64: 8, 8, 8>}]} {
    %0 = tpu.iota {dimensions = array<i32: 2>} : vector<8x8x16xi32>
    %c0_i32 = arith.constant 0 : i32
    %1 = vector.broadcast %c0_i32 : i32 to vector<8x8x16xi32>
    %2 = arith.shrsi %0, %1 : vector<8x8x16xi32>
    %c1_i32 = arith.constant 1 : i32
    %3 = vector.broadcast %c1_i32 : i32 to vector<8x8x16xi32>
    %4 = arith.andi %2, %3 : vector<8x8x16xi32>
    %c1_i32_0 = arith.constant 1 : i32
    %5 = vector.broadcast %c1_i32_0 : i32 to vector<8x8x16xi32>
    %6 = arith.shrsi %0, %5 : vector<8x8x16xi32>
    %c1_i32_1 = arith.constant 1 : i32
    %7 = vector.broadcast %c1_i32_1 : i32 to vector<8x8x16xi32>
    %8 = arith.andi %6, %7 : vector<8x8x16xi32>
    %c1_i32_2 = arith.constant 1 : i32
    %9 = vector.broadcast %c1_i32_2 : i32 to vector<8x8x16xi32>
    %10 = arith.cmpi eq, %4, %9 : vector<8x8x16xi32>
    %c0_i32_3 = arith.constant 0 : i32
    %11 = vector.broadcast %c0_i32_3 : i32 to vector<8x8x16xi32>
    %12 = arith.cmpi eq, %8, %11 : vector<8x8x16xi32>
    %13 = arith.andi %10, %12 : vector<8x8x16xi1>
    %c0_i32_4 = arith.constant 0 : i32
    %14 = vector.broadcast %c0_i32_4 : i32 to vector<8x8x16xi32>
    %15 = arith.cmpi eq, %4, %14 : vector<8x8x16xi32>
    %c1_i32_5 = arith.constant 1 : i32
    %16 = vector.broadcast %c1_i32_5 : i32 to vector<8x8x16xi32>
    %17 = arith.cmpi eq, %8, %16 : vector<8x8x16xi32>
    %18 = arith.andi %15, %17 : vector<8x8x16xi1>
    %c1_i32_6 = arith.constant 1 : i32
    %19 = vector.broadcast %c1_i32_6 : i32 to vector<8x8x16xi32>
    %20 = arith.shrsi %0, %19 : vector<8x8x16xi32>
    %c1_i32_7 = arith.constant 1 : i32
    %21 = vector.broadcast %c1_i32_7 : i32 to vector<8x8x16xi32>
    %22 = arith.andi %20, %21 : vector<8x8x16xi32>
    %c2_i32 = arith.constant 2 : i32
    %23 = vector.broadcast %c2_i32 : i32 to vector<8x8x16xi32>
    %24 = arith.shrsi %0, %23 : vector<8x8x16xi32>
    %c1_i32_8 = arith.constant 1 : i32
    %25 = vector.broadcast %c1_i32_8 : i32 to vector<8x8x16xi32>
    %26 = arith.andi %24, %25 : vector<8x8x16xi32>
    %c1_i32_9 = arith.constant 1 : i32
    %27 = vector.broadcast %c1_i32_9 : i32 to vector<8x8x16xi32>
    %28 = arith.cmpi eq, %22, %27 : vector<8x8x16xi32>
    %c0_i32_10 = arith.constant 0 : i32
    %29 = vector.broadcast %c0_i32_10 : i32 to vector<8x8x16xi32>
    %30 = arith.cmpi eq, %26, %29 : vector<8x8x16xi32>
    %31 = arith.andi %28, %30 : vector<8x8x16xi1>
    %c0_i32_11 = arith.constant 0 : i32
    %32 = vector.broadcast %c0_i32_11 : i32 to vector<8x8x16xi32>
    %33 = arith.cmpi eq, %22, %32 : vector<8x8x16xi32>
    %c1_i32_12 = arith.constant 1 : i32
    %34 = vector.broadcast %c1_i32_12 : i32 to vector<8x8x16xi32>
    %35 = arith.cmpi eq, %26, %34 : vector<8x8x16xi32>
    %36 = arith.andi %33, %35 : vector<8x8x16xi1>
    %c2_i32_13 = arith.constant 2 : i32
    %37 = vector.broadcast %c2_i32_13 : i32 to vector<8x8x16xi32>
    %38 = arith.shrsi %0, %37 : vector<8x8x16xi32>
    %c1_i32_14 = arith.constant 1 : i32
    %39 = vector.broadcast %c1_i32_14 : i32 to vector<8x8x16xi32>
    %40 = arith.andi %38, %39 : vector<8x8x16xi32>
    %c3_i32 = arith.constant 3 : i32
    %41 = vector.broadcast %c3_i32 : i32 to vector<8x8x16xi32>
    %42 = arith.shrsi %0, %41 : vector<8x8x16xi32>
    %c1_i32_15 = arith.constant 1 : i32
    %43 = vector.broadcast %c1_i32_15 : i32 to vector<8x8x16xi32>
    %44 = arith.andi %42, %43 : vector<8x8x16xi32>
    %c1_i32_16 = arith.constant 1 : i32
    %45 = vector.broadcast %c1_i32_16 : i32 to vector<8x8x16xi32>
    %46 = arith.cmpi eq, %40, %45 : vector<8x8x16xi32>
    %c0_i32_17 = arith.constant 0 : i32
    %47 = vector.broadcast %c0_i32_17 : i32 to vector<8x8x16xi32>
    %48 = arith.cmpi eq, %44, %47 : vector<8x8x16xi32>
    %49 = arith.andi %46, %48 : vector<8x8x16xi1>
    %c0_i32_18 = arith.constant 0 : i32
    %50 = vector.broadcast %c0_i32_18 : i32 to vector<8x8x16xi32>
    %51 = arith.cmpi eq, %40, %50 : vector<8x8x16xi32>
    %c1_i32_19 = arith.constant 1 : i32
    %52 = vector.broadcast %c1_i32_19 : i32 to vector<8x8x16xi32>
    %53 = arith.cmpi eq, %44, %52 : vector<8x8x16xi32>
    %54 = arith.andi %51, %53 : vector<8x8x16xi1>
    %c0 = arith.constant 0 : index
    %c0_20 = arith.constant 0 : index
    %c0_21 = arith.constant 0 : index
    %c0_22 = arith.constant 0 : index
    %55 = vector.load %arg2[%c0, %c0_20, %c0_21, %c0_22] : memref<8x8x2x16xf32, #tpu.memory_space<vmem>>, vector<8x8x1x16xf32>
    %56 = vector.shape_cast %55 : vector<8x8x1x16xf32> to vector<8x8x16xf32>
    %c0_23 = arith.constant 0 : index
    %c0_24 = arith.constant 0 : index
    %c1 = arith.constant 1 : index
    %c0_25 = arith.constant 0 : index
    %57 = vector.load %arg2[%c0_23, %c0_24, %c1, %c0_25] : memref<8x8x2x16xf32, #tpu.memory_space<vmem>>, vector<8x8x1x16xf32>
    %58 = vector.shape_cast %57 : vector<8x8x1x16xf32> to vector<8x8x16xf32>
    %c15_i32 = arith.constant 15 : i32
    %59 = tpu.dynamic_rotate %56 by %c15_i32 dim 2 : vector<8x8x16xf32>, i32 -> vector<8x8x16xf32>
    %c1_i32_26 = arith.constant 1 : i32
    %60 = tpu.dynamic_rotate %56 by %c1_i32_26 dim 2 : vector<8x8x16xf32>, i32 -> vector<8x8x16xf32>
    %61 = arith.select %18, %60, %56 : vector<8x8x16xi1>, vector<8x8x16xf32>
    %62 = arith.select %13, %59, %61 : vector<8x8x16xi1>, vector<8x8x16xf32>
    %c14_i32 = arith.constant 14 : i32
    %63 = tpu.dynamic_rotate %62 by %c14_i32 dim 2 : vector<8x8x16xf32>, i32 -> vector<8x8x16xf32>
    %c2_i32_27 = arith.constant 2 : i32
    %64 = tpu.dynamic_rotate %62 by %c2_i32_27 dim 2 : vector<8x8x16xf32>, i32 -> vector<8x8x16xf32>
    %65 = arith.select %36, %64, %62 : vector<8x8x16xi1>, vector<8x8x16xf32>
    %66 = arith.select %31, %63, %65 : vector<8x8x16xi1>, vector<8x8x16xf32>
    %c12_i32 = arith.constant 12 : i32
    %67 = tpu.dynamic_rotate %66 by %c12_i32 dim 2 : vector<8x8x16xf32>, i32 -> vector<8x8x16xf32>
    %c4_i32 = arith.constant 4 : i32
    %68 = tpu.dynamic_rotate %66 by %c4_i32 dim 2 : vector<8x8x16xf32>, i32 -> vector<8x8x16xf32>
    %69 = arith.select %54, %68, %66 : vector<8x8x16xi1>, vector<8x8x16xf32>
    %70 = arith.select %49, %67, %69 : vector<8x8x16xi1>, vector<8x8x16xf32>
    %71 = vector.extract_strided_slice %70 {offsets = [0, 0, 0], sizes = [8, 8, 8], strides = [1, 1, 1]} : vector<8x8x16xf32> to vector<8x8x8xf32>
    %c8_i32 = arith.constant 8 : i32
    %72 = tpu.dynamic_rotate %70 by %c8_i32 dim 2 : vector<8x8x16xf32>, i32 -> vector<8x8x16xf32>
    %73 = vector.extract_strided_slice %72 {offsets = [0, 0, 0], sizes = [8, 8, 8], strides = [1, 1, 1]} : vector<8x8x16xf32> to vector<8x8x8xf32>
    %c15_i32_28 = arith.constant 15 : i32
    %74 = tpu.dynamic_rotate %58 by %c15_i32_28 dim 2 : vector<8x8x16xf32>, i32 -> vector<8x8x16xf32>
    %c1_i32_29 = arith.constant 1 : i32
    %75 = tpu.dynamic_rotate %58 by %c1_i32_29 dim 2 : vector<8x8x16xf32>, i32 -> vector<8x8x16xf32>
    %76 = arith.select %18, %75, %58 : vector<8x8x16xi1>, vector<8x8x16xf32>
    %77 = arith.select %13, %74, %76 : vector<8x8x16xi1>, vector<8x8x16xf32>
    %c14_i32_30 = arith.constant 14 : i32
    %78 = tpu.dynamic_rotate %77 by %c14_i32_30 dim 2 : vector<8x8x16xf32>, i32 -> vector<8x8x16xf32>
    %c2_i32_31 = arith.constant 2 : i32
    %79 = tpu.dynamic_rotate %77 by %c2_i32_31 dim 2 : vector<8x8x16xf32>, i32 -> vector<8x8x16xf32>
    %80 = arith.select %36, %79, %77 : vector<8x8x16xi1>, vector<8x8x16xf32>
    %81 = arith.select %31, %78, %80 : vector<8x8x16xi1>, vector<8x8x16xf32>
    %c12_i32_32 = arith.constant 12 : i32
    %82 = tpu.dynamic_rotate %81 by %c12_i32_32 dim 2 : vector<8x8x16xf32>, i32 -> vector<8x8x16xf32>
    %c4_i32_33 = arith.constant 4 : i32
    %83 = tpu.dynamic_rotate %81 by %c4_i32_33 dim 2 : vector<8x8x16xf32>, i32 -> vector<8x8x16xf32>
    %84 = arith.select %54, %83, %81 : vector<8x8x16xi1>, vector<8x8x16xf32>
    %85 = arith.select %49, %82, %84 : vector<8x8x16xi1>, vector<8x8x16xf32>
    %86 = vector.extract_strided_slice %85 {offsets = [0, 0, 0], sizes = [8, 8, 8], strides = [1, 1, 1]} : vector<8x8x16xf32> to vector<8x8x8xf32>
    %c8_i32_34 = arith.constant 8 : i32
    %87 = tpu.dynamic_rotate %85 by %c8_i32_34 dim 2 : vector<8x8x16xf32>, i32 -> vector<8x8x16xf32>
    %88 = vector.extract_strided_slice %87 {offsets = [0, 0, 0], sizes = [8, 8, 8], strides = [1, 1, 1]} : vector<8x8x16xf32> to vector<8x8x8xf32>
    %89 = arith.addf %71, %86 : vector<8x8x8xf32>
    %90 = arith.addf %73, %88 : vector<8x8x8xf32>
    %91 = arith.subf %86, %71 : vector<8x8x8xf32>
    %92 = arith.subf %88, %73 : vector<8x8x8xf32>
    %93 = arith.addf %89, %90 : vector<8x8x8xf32>
    %cst = arith.constant 5.000000e-01 : f32
    %94 = vector.broadcast %cst : f32 to vector<8x8x8xf32>
    %95 = arith.mulf %93, %94 : vector<8x8x8xf32>
    %c0_35 = arith.constant 0 : index
    %c0_36 = arith.constant 0 : index
    %c0_37 = arith.constant 0 : index
    %96 = vector.load %arg3[%c0_35, %c0_36, %c0_37] : memref<8x8x8xf32, #tpu.memory_space<vmem>>, vector<8x8x8xf32>
    tpu.vector_store %arg3[%c0_35, %c0_36, %c0_37], %95 {strides = array<i32>} : memref<8x8x8xf32, #tpu.memory_space<vmem>>, vector<8x8x8xf32>,
    %97 = arith.addf %91, %92 : vector<8x8x8xf32>
    %cst_38 = arith.constant 5.000000e-01 : f32
    %98 = vector.broadcast %cst_38 : f32 to vector<8x8x8xf32>
    %99 = arith.mulf %97, %98 : vector<8x8x8xf32>
    %c0_39 = arith.constant 0 : index
    %c0_40 = arith.constant 0 : index
    %c0_41 = arith.constant 0 : index
    %100 = vector.load %arg4[%c0_39, %c0_40, %c0_41] : memref<8x8x8xf32, #tpu.memory_space<vmem>>, vector<8x8x8xf32>
    tpu.vector_store %arg4[%c0_39, %c0_40, %c0_41], %99 {strides = array<i32>} : memref<8x8x8xf32, #tpu.memory_space<vmem>>, vector<8x8x8xf32>,
    %101 = arith.subf %90, %89 : vector<8x8x8xf32>
    %cst_42 = arith.constant 5.000000e-01 : f32
    %102 = vector.broadcast %cst_42 : f32 to vector<8x8x8xf32>
    %103 = arith.mulf %101, %102 : vector<8x8x8xf32>
    %c0_43 = arith.constant 0 : index
    %c0_44 = arith.constant 0 : index
    %c0_45 = arith.constant 0 : index
    %104 = vector.load %arg5[%c0_43, %c0_44, %c0_45] : memref<8x8x8xf32, #tpu.memory_space<vmem>>, vector<8x8x8xf32>
    tpu.vector_store %arg5[%c0_43, %c0_44, %c0_45], %103 {strides = array<i32>} : memref<8x8x8xf32, #tpu.memory_space<vmem>>, vector<8x8x8xf32>,
    %105 = arith.subf %92, %91 : vector<8x8x8xf32>
    %cst_46 = arith.constant 5.000000e-01 : f32
    %106 = vector.broadcast %cst_46 : f32 to vector<8x8x8xf32>
    %107 = arith.mulf %105, %106 : vector<8x8x8xf32>
    %c0_47 = arith.constant 0 : index
    %c0_48 = arith.constant 0 : index
    %c0_49 = arith.constant 0 : index
    %108 = vector.load %arg6[%c0_47, %c0_48, %c0_49] : memref<8x8x8xf32, #tpu.memory_space<vmem>>, vector<8x8x8xf32>
    tpu.vector_store %arg6[%c0_47, %c0_48, %c0_49], %107 {strides = array<i32>} : memref<8x8x8xf32, #tpu.memory_space<vmem>>, vector<8x8x8xf32>,
    return
  }
  func.func @transform_0(%arg0: i32, %arg1: i32) -> (i32, i32, i32, i32) {
    %c0_i32 = arith.constant 0 : i32
    %c0_i32_0 = arith.constant 0 : i32
    %c0_i32_1 = arith.constant 0 : i32
    return %arg0, %arg1, %c0_i32, %c0_i32_0 : i32, i32, i32, i32
  }
  func.func @transform_1(%arg0: i32, %arg1: i32) -> (i32, i32, i32) {
    %c0_i32 = arith.constant 0 : i32
    %c0_i32_0 = arith.constant 0 : i32
    return %arg0, %arg1, %c0_i32 : i32, i32, i32
  }
  func.func @transform_2(%arg0: i32, %arg1: i32) -> (i32, i32, i32) {
    %c0_i32 = arith.constant 0 : i32
    %c0_i32_0 = arith.constant 0 : i32
    return %arg0, %arg1, %c0_i32 : i32, i32, i32
  }
  func.func @transform_3(%arg0: i32, %arg1: i32) -> (i32, i32, i32) {
    %c0_i32 = arith.constant 0 : i32
    %c0_i32_0 = arith.constant 0 : i32
    return %arg0, %arg1, %c0_i32 : i32, i32, i32
  }
  func.func @transform_4(%arg0: i32, %arg1: i32) -> (i32, i32, i32) {
    %c0_i32 = arith.constant 0 : i32
    %c0_i32_0 = arith.constant 0 : i32
    return %arg0, %arg1, %c0_i32 : i32, i32, i32
  }
}

module attributes {stable_mosaic.version = 11 : i64} {
  func.func @kernel(%arg0: i32, %arg1: i32, %arg2: memref<4x8x64xf32, #tpu.memory_space<vmem>>, %arg3: memref<8x64xf32, #tpu.memory_space<vmem>>, %arg4: memref<8x64xf32, #tpu.memory_space<vmem>>, %arg5: memref<8x64xf32, #tpu.memory_space<vmem>>, %arg6: memref<8x64xf32, #tpu.memory_space<vmem>>) attributes {dimension_semantics = [#tpu.dimension_semantics<parallel>, #tpu.dimension_semantics<parallel>], iteration_bounds = array<i64: 1, 1>, scalar_prefetch = 0 : i64, scratch_operands = 0 : i64, tpu.core_type = #tpu.core_type<tc>, window_params = [{transform_indices = @transform_0, window_bounds = array<i64: 4, 8, 64>}, {transform_indices = @transform_1, window_bounds = array<i64: 8, 64>}, {transform_indices = @transform_2, window_bounds = array<i64: 8, 64>}, {transform_indices = @transform_3, window_bounds = array<i64: 8, 64>}, {transform_indices = @transform_4, window_bounds = array<i64: 8, 64>}]} {
    %c0 = arith.constant 0 : index
    %c0_0 = arith.constant 0 : index
    %c0_1 = arith.constant 0 : index
    %0 = vector.load %arg2[%c0, %c0_0, %c0_1] : memref<4x8x64xf32, #tpu.memory_space<vmem>>, vector<1x8x64xf32>
    %1 = vector.shape_cast %0 : vector<1x8x64xf32> to vector<8x64xf32>
    %c1 = arith.constant 1 : index
    %c0_2 = arith.constant 0 : index
    %c0_3 = arith.constant 0 : index
    %2 = vector.load %arg2[%c1, %c0_2, %c0_3] : memref<4x8x64xf32, #tpu.memory_space<vmem>>, vector<1x8x64xf32>
    %3 = vector.shape_cast %2 : vector<1x8x64xf32> to vector<8x64xf32>
    %c2 = arith.constant 2 : index
    %c0_4 = arith.constant 0 : index
    %c0_5 = arith.constant 0 : index
    %4 = vector.load %arg2[%c2, %c0_4, %c0_5] : memref<4x8x64xf32, #tpu.memory_space<vmem>>, vector<1x8x64xf32>
    %5 = vector.shape_cast %4 : vector<1x8x64xf32> to vector<8x64xf32>
    %c3 = arith.constant 3 : index
    %c0_6 = arith.constant 0 : index
    %c0_7 = arith.constant 0 : index
    %6 = vector.load %arg2[%c3, %c0_6, %c0_7] : memref<4x8x64xf32, #tpu.memory_space<vmem>>, vector<1x8x64xf32>
    %7 = vector.shape_cast %6 : vector<1x8x64xf32> to vector<8x64xf32>
    %8 = arith.addf %1, %3 : vector<8x64xf32>
    %9 = arith.addf %5, %7 : vector<8x64xf32>
    %10 = arith.subf %3, %1 : vector<8x64xf32>
    %11 = arith.subf %7, %5 : vector<8x64xf32>
    %12 = arith.addf %8, %9 : vector<8x64xf32>
    %cst = arith.constant 5.000000e-01 : f32
    %13 = vector.broadcast %cst : f32 to vector<8x64xf32>
    %14 = arith.mulf %12, %13 : vector<8x64xf32>
    %c0_8 = arith.constant 0 : index
    %c0_9 = arith.constant 0 : index
    %15 = vector.load %arg3[%c0_8, %c0_9] : memref<8x64xf32, #tpu.memory_space<vmem>>, vector<8x64xf32>
    tpu.vector_store %arg3[%c0_8, %c0_9], %14 {strides = array<i32>} : memref<8x64xf32, #tpu.memory_space<vmem>>, vector<8x64xf32>,
    %16 = arith.addf %10, %11 : vector<8x64xf32>
    %cst_10 = arith.constant 5.000000e-01 : f32
    %17 = vector.broadcast %cst_10 : f32 to vector<8x64xf32>
    %18 = arith.mulf %16, %17 : vector<8x64xf32>
    %c0_11 = arith.constant 0 : index
    %c0_12 = arith.constant 0 : index
    %19 = vector.load %arg4[%c0_11, %c0_12] : memref<8x64xf32, #tpu.memory_space<vmem>>, vector<8x64xf32>
    tpu.vector_store %arg4[%c0_11, %c0_12], %18 {strides = array<i32>} : memref<8x64xf32, #tpu.memory_space<vmem>>, vector<8x64xf32>,
    %20 = arith.subf %9, %8 : vector<8x64xf32>
    %cst_13 = arith.constant 5.000000e-01 : f32
    %21 = vector.broadcast %cst_13 : f32 to vector<8x64xf32>
    %22 = arith.mulf %20, %21 : vector<8x64xf32>
    %c0_14 = arith.constant 0 : index
    %c0_15 = arith.constant 0 : index
    %23 = vector.load %arg5[%c0_14, %c0_15] : memref<8x64xf32, #tpu.memory_space<vmem>>, vector<8x64xf32>
    tpu.vector_store %arg5[%c0_14, %c0_15], %22 {strides = array<i32>} : memref<8x64xf32, #tpu.memory_space<vmem>>, vector<8x64xf32>,
    %24 = arith.subf %11, %10 : vector<8x64xf32>
    %cst_16 = arith.constant 5.000000e-01 : f32
    %25 = vector.broadcast %cst_16 : f32 to vector<8x64xf32>
    %26 = arith.mulf %24, %25 : vector<8x64xf32>
    %c0_17 = arith.constant 0 : index
    %c0_18 = arith.constant 0 : index
    %27 = vector.load %arg6[%c0_17, %c0_18] : memref<8x64xf32, #tpu.memory_space<vmem>>, vector<8x64xf32>
    tpu.vector_store %arg6[%c0_17, %c0_18], %26 {strides = array<i32>} : memref<8x64xf32, #tpu.memory_space<vmem>>, vector<8x64xf32>,
    return
  }
  func.func @transform_0(%arg0: i32, %arg1: i32) -> (i32, i32, i32) {
    %c0_i32 = arith.constant 0 : i32
    %c0_i32_0 = arith.constant 0 : i32
    return %c0_i32, %arg0, %arg1 : i32, i32, i32
  }
  func.func @transform_1(%arg0: i32, %arg1: i32) -> (i32, i32) {
    %c0_i32 = arith.constant 0 : i32
    return %arg0, %arg1 : i32, i32
  }
  func.func @transform_2(%arg0: i32, %arg1: i32) -> (i32, i32) {
    %c0_i32 = arith.constant 0 : i32
    return %arg0, %arg1 : i32, i32
  }
  func.func @transform_3(%arg0: i32, %arg1: i32) -> (i32, i32) {
    %c0_i32 = arith.constant 0 : i32
    return %arg0, %arg1 : i32, i32
  }
  func.func @transform_4(%arg0: i32, %arg1: i32) -> (i32, i32) {
    %c0_i32 = arith.constant 0 : i32
    return %arg0, %arg1 : i32, i32
  }
}

</mosaic_0001>

<llo_original>
// kernel: run.1
$region0: #{run.1}
  #allocation0 [shape = 'u32[]', space=smem, size = 0x4, offset = 0x4, fixed_abs, tag = 'smem constant byte address 0x4 - core index']
  #allocation1 [shape = 'u32[144,128]{1,0:T(1,128)}', space=vmem, size = 0x12000, scoped, tag = 'internal scratch']
  %s0 = inlined_call_operand.hbm [shape: f32[8,8,2,16], index: 0, kind: input, shape index: {}]
  %s1 = inlined_call_operand.hbm [shape: f32[8,8,8], index: 1, kind: output, shape index: {0}]
  %s2 = inlined_call_operand.hbm [shape: f32[8,8,8], index: 2, kind: output, shape index: {1}]
  %s3 = inlined_call_operand.hbm [shape: f32[8,8,8], index: 3, kind: output, shape index: {2}]
  %s4 = inlined_call_operand.hbm [shape: f32[8,8,8], index: 4, kind: output, shape index: {3}]
  %5 = xla_tuple %s1, %s2, %s3, %s4
  %s6 = sld [smem:[#allocation0]]
  $region42: #{run.1} parent=0
    _
  %s8 = ssub.s32 1, %s6
  %s9 = scalar_select 0, %s8, %s6
  $region1: #{run.1} parent=0
    #allocation2 [shape = 'u8[65536]{0}', space=vmem, size = 0x10000, scoped, tag = 'input window, operand 0, single buffered']
    #allocation3 [shape = 's32[1]{0}', space=sflag, size = 0x4, scoped, tag = 'scoped memory for run.1']
    #allocation4 [shape = 's32[1]{0}', space=sflag, size = 0x4, scoped, tag = 'scoped memory for run.1']
    #allocation5 [shape = 'u8[32768]{0}', space=vmem, size = 0x8000, scoped, tag = 'output window, operand 0, single buffered']
    #allocation6 [shape = 'u8[32768]{0}', space=vmem, size = 0x8000, scoped, tag = 'output window, operand 1, single buffered']
    #allocation7 [shape = 's32[1]{0}', space=sflag, size = 0x4, scoped, tag = 'scoped memory for run.1']
    #allocation8 [shape = 'u8[32768]{0}', space=vmem, size = 0x8000, scoped, tag = 'output window, operand 2, single buffered']
    #allocation9 [shape = 'u8[32768]{0}', space=vmem, size = 0x8000, scoped, tag = 'output window, operand 3, single buffered']
    #allocation10 [shape = 's32[1]{0}', space=sflag, size = 0x4, scoped, tag = 'scoped memory for run.1']
    %10 = vsyncpa [#allocation3], 0
    %11 = vsyncpa [#allocation4], 0
    %12 = vsyncpa [#allocation7], 0
    %13 = vsyncpa [#allocation10], 0
    // Predicated region
    $region2: #{run.1} parent=1 // pred_check
      _
    $region3: #{run.1} parent=1 // pred_check_branch
      %15 = sbr.rel (0) target = $region5
    $region4: #{run.1} parent=1 // pred_region
      %s17 = ssub.s32 2048, 2048
      %18 = vsyncadd [#allocation3], %s17
      %s19 = sshll.u32 [#allocation2], 4
      %s20 = int_to_ptr.vmem [resolvable:$true] %s19
      %25 = dma.hbm_to_vmem [thread:$0]  %s0, 2048, %s20, [#allocation3], 32, 32, 2
    $region5: #{run.1} parent=1 // pred_fallthru
      _
    // Predicated region
    $region6: #{run.1} parent=1 // pred_check
      _
    $region7: #{run.1} parent=1 // pred_check_branch
      %27 = sbr.rel (0) target = $region9
    $region8: #{run.1} parent=1 // pred_region
      %28 = dma.done [#allocation3], 2048
    $region9: #{run.1} parent=1 // pred_fallthru
      _
    %v29 = vlaneseq
    %v30 = vand.u32 %v29, 127
    %v31 = vand.u32 %v30, 1
    %v32 = vshra.s32 %v30, 1
    %v33 = vand.u32 %v32, 1
    %vm34 = vcmp.eq.s32.totalorder %v31, 1
    %vm35 = vcmp.eq.s32.totalorder %v33, 0
    %vm36 = vmand %vm34, %vm35
    %vm37 = vcmp.eq.s32.totalorder %v31, 0
    %vm38 = vcmp.eq.s32.totalorder %v33, 1
    %vm39 = vmand %vm37, %vm38
    %v40 = vshra.s32 %v30, 2
    %v41 = vand.u32 %v40, 1
    %vm42 = vcmp.eq.s32.totalorder %v41, 0
    %vm43 = vmand %vm38, %vm42
    %vm44 = vcmp.eq.s32.totalorder %v41, 1
    %vm45 = vmand %vm35, %vm44
    %v46 = vshra.s32 %v30, 3
    %v47 = vand.u32 %v46, 1
    %vm48 = vcmp.eq.s32.totalorder %v47, 0
    %vm49 = vmand %vm44, %vm48
    %vm50 = vcmp.eq.s32.totalorder %v47, 1
    %vm51 = vmand %vm42, %vm50
    %v52 = vld [vmem:[#allocation2] sm:$0x1]
    %v53 = vld [vmem:[#allocation2 + $0x2] sm:$0x1]
    %v54 = vld [vmem:[#allocation2 + $0x4] sm:$0x1]
    %v55 = vld [vmem:[#allocation2 + $0x6] sm:$0x1]
    %v56 = vld [vmem:[#allocation2 + $0x8] sm:$0x1]
    %v57 = vld [vmem:[#allocation2 + $0xa] sm:$0x1]
    %v58 = vld [vmem:[#allocation2 + $0xc] sm:$0x1]
    %v59 = vld [vmem:[#allocation2 + $0xe] sm:$0x1]
    %v60 = vld [vmem:[#allocation2 + $0x10] sm:$0x1]
    %v61 = vld [vmem:[#allocation2 + $0x12] sm:$0x1]
    %v62 = vld [vmem:[#allocation2 + $0x14] sm:$0x1]
    %v63 = vld [vmem:[#allocation2 + $0x16] sm:$0x1]
    %v64 = vld [vmem:[#allocation2 + $0x18] sm:$0x1]
    %v65 = vld [vmem:[#allocation2 + $0x1a] sm:$0x1]
    %v66 = vld [vmem:[#allocation2 + $0x1c] sm:$0x1]
    %v67 = vld [vmem:[#allocation2 + $0x1e] sm:$0x1]
    %v68 = vld [vmem:[#allocation2 + $0x20] sm:$0x1]
    %v69 = vld [vmem:[#allocation2 + $0x22] sm:$0x1]
    %v70 = vld [vmem:[#allocation2 + $0x24] sm:$0x1]
    %v71 = vld [vmem:[#allocation2 + $0x26] sm:$0x1]
    %v72 = vld [vmem:[#allocation2 + $0x28] sm:$0x1]
    %v73 = vld [vmem:[#allocation2 + $0x2a] sm:$0x1]
    %v74 = vld [vmem:[#allocation2 + $0x2c] sm:$0x1]
    %v75 = vld [vmem:[#allocation2 + $0x2e] sm:$0x1]
    %v76 = vld [vmem:[#allocation2 + $0x30] sm:$0x1]
    %v77 = vld [vmem:[#allocation2 + $0x32] sm:$0x1]
    %v78 = vld [vmem:[#allocation2 + $0x34] sm:$0x1]
    %v79 = vld [vmem:[#allocation2 + $0x36] sm:$0x1]
    %v80 = vld [vmem:[#allocation2 + $0x38] sm:$0x1]
    %v81 = vld [vmem:[#allocation2 + $0x3a] sm:$0x1]
    %v82 = vld [vmem:[#allocation2 + $0x3c] sm:$0x1]
    %v83 = vld [vmem:[#allocation2 + $0x3e] sm:$0x1]
    %v84 = vld [vmem:[#allocation2 + $0x40] sm:$0x1]
    %v85 = vld [vmem:[#allocation2 + $0x42] sm:$0x1]
    %v86 = vld [vmem:[#allocation2 + $0x44] sm:$0x1]
    %v87 = vld [vmem:[#allocation2 + $0x46] sm:$0x1]
    %v88 = vld [vmem:[#allocation2 + $0x48] sm:$0x1]
    %v89 = vld [vmem:[#allocation2 + $0x4a] sm:$0x1]
    %v90 = vld [vmem:[#allocation2 + $0x4c] sm:$0x1]
    %v91 = vld [vmem:[#allocation2 + $0x4e] sm:$0x1]
    %v92 = vld [vmem:[#allocation2 + $0x50] sm:$0x1]
    %v93 = vld [vmem:[#allocation2 + $0x52] sm:$0x1]
    %v94 = vld [vmem:[#allocation2 + $0x54] sm:$0x1]
    %v95 = vld [vmem:[#allocation2 + $0x56] sm:$0x1]
    %v96 = vld [vmem:[#allocation2 + $0x58] sm:$0x1]
    %v97 = vld [vmem:[#allocation2 + $0x5a] sm:$0x1]
    %v98 = vld [vmem:[#allocation2 + $0x5c] sm:$0x1]
    %v99 = vld [vmem:[#allocation2 + $0x5e] sm:$0x1]
    %v100 = vld [vmem:[#allocation2 + $0x60] sm:$0x1]
    %v101 = vld [vmem:[#allocation2 + $0x62] sm:$0x1]
    %v102 = vld [vmem:[#allocation2 + $0x64] sm:$0x1]
    %v103 = vld [vmem:[#allocation2 + $0x66] sm:$0x1]
    %v104 = vld [vmem:[#allocation2 + $0x68] sm:$0x1]
    %v105 = vld [vmem:[#allocation2 + $0x6a] sm:$0x1]
    %v106 = vld [vmem:[#allocation2 + $0x6c] sm:$0x1]
    %v107 = vld [vmem:[#allocation2 + $0x6e] sm:$0x1]
    %v108 = vld [vmem:[#allocation2 + $0x70] sm:$0x1]
    %v109 = vld [vmem:[#allocation2 + $0x72] sm:$0x1]
    %v110 = vld [vmem:[#allocation2 + $0x74] sm:$0x1]
    %v111 = vld [vmem:[#allocation2 + $0x76] sm:$0x1]
    %v112 = vld [vmem:[#allocation2 + $0x78] sm:$0x1]
    %v113 = vld [vmem:[#allocation2 + $0x7a] sm:$0x1]
    %v114 = vld [vmem:[#allocation2 + $0x7c] sm:$0x1]
    %v115 = vld [vmem:[#allocation2 + $0x7e] sm:$0x1]
    %v116 = vld [vmem:[#allocation2 + $0x1] sm:$0x1]
    %v117 = vld [vmem:[#allocation2 + $0x3] sm:$0x1]
    %v118 = vld [vmem:[#allocation2 + $0x5] sm:$0x1]
    %v119 = vld [vmem:[#allocation2 + $0x7] sm:$0x1]
    %v120 = vld [vmem:[#allocation2 + $0x9] sm:$0x1]
    %v121 = vld [vmem:[#allocation2 + $0xb] sm:$0x1]
    %v122 = vld [vmem:[#allocation2 + $0xd] sm:$0x1]
    %v123 = vld [vmem:[#allocation2 + $0xf] sm:$0x1]
    %v124 = vld [vmem:[#allocation2 + $0x11] sm:$0x1]
    %v125 = vld [vmem:[#allocation2 + $0x13] sm:$0x1]
    %v126 = vld [vmem:[#allocation2 + $0x15] sm:$0x1]
    %v127 = vld [vmem:[#allocation2 + $0x17] sm:$0x1]
    %v128 = vld [vmem:[#allocation2 + $0x19] sm:$0x1]
    %v129 = vld [vmem:[#allocation2 + $0x1b] sm:$0x1]
    %v130 = vld [vmem:[#allocation2 + $0x1d] sm:$0x1]
    %v131 = vld [vmem:[#allocation2 + $0x1f] sm:$0x1]
    %v132 = vld [vmem:[#allocation2 + $0x21] sm:$0x1]
    %v133 = vld [vmem:[#allocation2 + $0x23] sm:$0x1]
    %v134 = vld [vmem:[#allocation2 + $0x25] sm:$0x1]
    %v135 = vld [vmem:[#allocation2 + $0x27] sm:$0x1]
    %v136 = vld [vmem:[#allocation2 + $0x29] sm:$0x1]
    %v137 = vld [vmem:[#allocation2 + $0x2b] sm:$0x1]
    %v138 = vld [vmem:[#allocation2 + $0x2d] sm:$0x1]
    %v139 = vld [vmem:[#allocation2 + $0x2f] sm:$0x1]
    %v140 = vld [vmem:[#allocation2 + $0x31] sm:$0x1]
    %v141 = vld [vmem:[#allocation2 + $0x33] sm:$0x1]
    %v142 = vld [vmem:[#allocation2 + $0x35] sm:$0x1]
    %v143 = vld [vmem:[#allocation2 + $0x37] sm:$0x1]
    %v144 = vld [vmem:[#allocation2 + $0x39] sm:$0x1]
    %v145 = vld [vmem:[#allocation2 + $0x3b] sm:$0x1]
    %v146 = vld [vmem:[#allocation2 + $0x3d] sm:$0x1]
    %v147 = vld [vmem:[#allocation2 + $0x3f] sm:$0x1]
    %v148 = vld [vmem:[#allocation2 + $0x41] sm:$0x1]
    %v149 = vld [vmem:[#allocation2 + $0x43] sm:$0x1]
    %v150 = vld [vmem:[#allocation2 + $0x45] sm:$0x1]
    %v151 = vld [vmem:[#allocation2 + $0x47] sm:$0x1]
    %v152 = vld [vmem:[#allocation2 + $0x49] sm:$0x1]
    %v153 = vld [vmem:[#allocation2 + $0x4b] sm:$0x1]
    %v154 = vld [vmem:[#allocation2 + $0x4d] sm:$0x1]
    %v155 = vld [vmem:[#allocation2 + $0x4f] sm:$0x1]
    %v156 = vld [vmem:[#allocation2 + $0x51] sm:$0x1]
    %v157 = vld [vmem:[#allocation2 + $0x53] sm:$0x1]
    %v158 = vld [vmem:[#allocation2 + $0x55] sm:$0x1]
    %v159 = vld [vmem:[#allocation2 + $0x57] sm:$0x1]
    %v160 = vld [vmem:[#allocation2 + $0x59] sm:$0x1]
    %v161 = vld [vmem:[#allocation2 + $0x5b] sm:$0x1]
    %v162 = vld [vmem:[#allocation2 + $0x5d] sm:$0x1]
    %v163 = vld [vmem:[#allocation2 + $0x5f] sm:$0x1]
    %v164 = vld [vmem:[#allocation2 + $0x61] sm:$0x1]
    %v165 = vld [vmem:[#allocation2 + $0x63] sm:$0x1]
    %v166 = vld [vmem:[#allocation2 + $0x65] sm:$0x1]
    %v167 = vld [vmem:[#allocation2 + $0x67] sm:$0x1]
    %v168 = vld [vmem:[#allocation2 + $0x69] sm:$0x1]
    %v169 = vld [vmem:[#allocation2 + $0x6b] sm:$0x1]
    %v170 = vld [vmem:[#allocation2 + $0x6d] sm:$0x1]
    %v171 = vld [vmem:[#allocation2 + $0x6f] sm:$0x1]
    %v172 = vld [vmem:[#allocation2 + $0x71] sm:$0x1]
    %v173 = vld [vmem:[#allocation2 + $0x73] sm:$0x1]
    %v174 = vld [vmem:[#allocation2 + $0x75] sm:$0x1]
    %v175 = vld [vmem:[#allocation2 + $0x77] sm:$0x1]
    %v176 = vld [vmem:[#allocation2 + $0x79] sm:$0x1]
    %v177 = vld [vmem:[#allocation2 + $0x7b] sm:$0x1]
    %v178 = vld [vmem:[#allocation2 + $0x7d] sm:$0x1]
    %v179 = vld [vmem:[#allocation2 + $0x7f] sm:$0x1]
    %v244 = vrot.slane %v53, 7
    %vm245 = vcmask 1041409
    %v246 = vsel %vm245, %v244, %v52
    %v247 = vrot.slane %v54, 6
    %vm248 = vcmask 1042434
    %v249 = vsel %vm248, %v247, %v246
    %v250 = vrot.slane %v55, 5
    %vm251 = vcmask 1043459
    %v252 = vsel %vm251, %v250, %v249
    %v253 = vrot.slane %v56, 4
    %vm254 = vcmask 1044484
    %v255 = vsel %vm254, %v253, %v252
    %v256 = vrot.slane %v57, 3
    %vm257 = vcmask 1045509
    %v258 = vsel %vm257, %v256, %v255
    %v259 = vrot.slane %v58, 2
    %vm260 = vcmask 1046534
    %v261 = vsel %vm260, %v259, %v258
    %v262 = vrot.slane %v59, 1
    %vm263 = vcmask 1047559
    %v264 = vsel %vm263, %v262, %v261
    %v265 = vrot.slane %v61, 7
    %v266 = vsel %vm245, %v265, %v60
    %v267 = vrot.slane %v62, 6
    %v268 = vsel %vm248, %v267, %v266
    %v269 = vrot.slane %v63, 5
    %v270 = vsel %vm251, %v269, %v268
    %v271 = vrot.slane %v64, 4
    %v272 = vsel %vm254, %v271, %v270
    %v273 = vrot.slane %v65, 3
    %v274 = vsel %vm257, %v273, %v272
    %v275 = vrot.slane %v66, 2
    %v276 = vsel %vm260, %v275, %v274
    %v277 = vrot.slane %v67, 1
    %v278 = vsel %vm263, %v277, %v276
    %v279 = vrot.slane %v69, 7
    %v280 = vsel %vm245, %v279, %v68
    %v281 = vrot.slane %v70, 6
    %v282 = vsel %vm248, %v281, %v280
    %v283 = vrot.slane %v71, 5
    %v284 = vsel %vm251, %v283, %v282
    %v285 = vrot.slane %v72, 4
    %v286 = vsel %vm254, %v285, %v284
    %v287 = vrot.slane %v73, 3
    %v288 = vsel %vm257, %v287, %v286
    %v289 = vrot.slane %v74, 2
    %v290 = vsel %vm260, %v289, %v288
    %v291 = vrot.slane %v75, 1
    %v292 = vsel %vm263, %v291, %v290
    %v293 = vrot.slane %v77, 7
    %v294 = vsel %vm245, %v293, %v76
    %v295 = vrot.slane %v78, 6
    %v296 = vsel %vm248, %v295, %v294
    %v297 = vrot.slane %v79, 5
    %v298 = vsel %vm251, %v297, %v296
    %v299 = vrot.slane %v80, 4
    %v300 = vsel %vm254, %v299, %v298
    %v301 = vrot.slane %v81, 3
    %v302 = vsel %vm257, %v301, %v300
    %v303 = vrot.slane %v82, 2
    %v304 = vsel %vm260, %v303, %v302
    %v305 = vrot.slane %v83, 1
    %v306 = vsel %vm263, %v305, %v304
    %v307 = vrot.slane %v85, 7
    %v308 = vsel %vm245, %v307, %v84
    %v309 = vrot.slane %v86, 6
    %v310 = vsel %vm248, %v309, %v308
    %v311 = vrot.slane %v87, 5
    %v312 = vsel %vm251, %v311, %v310
    %v313 = vrot.slane %v88, 4
    %v314 = vsel %vm254, %v313, %v312
    %v315 = vrot.slane %v89, 3
    %v316 = vsel %vm257, %v315, %v314
    %v317 = vrot.slane %v90, 2
    %v318 = vsel %vm260, %v317, %v316
    %v319 = vrot.slane %v91, 1
    %v320 = vsel %vm263, %v319, %v318
    %v321 = vrot.slane %v93, 7
    %v322 = vsel %vm245, %v321, %v92
    %v323 = vrot.slane %v94, 6
    %v324 = vsel %vm248, %v323, %v322
    %v325 = vrot.slane %v95, 5
    %v326 = vsel %vm251, %v325, %v324
    %v327 = vrot.slane %v96, 4
    %v328 = vsel %vm254, %v327, %v326
    %v329 = vrot.slane %v97, 3
    %v330 = vsel %vm257, %v329, %v328
    %v331 = vrot.slane %v98, 2
    %v332 = vsel %vm260, %v331, %v330
    %v333 = vrot.slane %v99, 1
    %v334 = vsel %vm263, %v333, %v332
    %v335 = vrot.slane %v101, 7
    %v336 = vsel %vm245, %v335, %v100
    %v337 = vrot.slane %v102, 6
    %v338 = vsel %vm248, %v337, %v336
    %v339 = vrot.slane %v103, 5
    %v340 = vsel %vm251, %v339, %v338
    %v341 = vrot.slane %v104, 4
    %v342 = vsel %vm254, %v341, %v340
    %v343 = vrot.slane %v105, 3
    %v344 = vsel %vm257, %v343, %v342
    %v345 = vrot.slane %v106, 2
    %v346 = vsel %vm260, %v345, %v344
    %v347 = vrot.slane %v107, 1
    %v348 = vsel %vm263, %v347, %v346
    %v349 = vrot.slane %v109, 7
    %v350 = vsel %vm245, %v349, %v108
    %v351 = vrot.slane %v110, 6
    %v352 = vsel %vm248, %v351, %v350
    %v353 = vrot.slane %v111, 5
    %v354 = vsel %vm251, %v353, %v352
    %v355 = vrot.slane %v112, 4
    %v356 = vsel %vm254, %v355, %v354
    %v357 = vrot.slane %v113, 3
    %v358 = vsel %vm257, %v357, %v356
    %v359 = vrot.slane %v114, 2
    %v360 = vsel %vm260, %v359, %v358
    %v361 = vrot.slane %v115, 1
    %v362 = vsel %vm263, %v361, %v360
    %vm371 = vcmask 1047680
    %372 = vrot.lane.b32.xlu0 %v264, 16
    %v373 = vpop.permute.xlu0 %372
    %v374 = vsel %vm371, %v373, %v264
    %375 = vrot.lane.b32.xlu0 %v278, 16
    %v376 = vpop.permute.xlu0 %375
    %v377 = vsel %vm371, %v376, %v278
    %378 = vrot.lane.b32.xlu0 %v292, 16
    %v379 = vpop.permute.xlu0 %378
    %v380 = vsel %vm371, %v379, %v292
    %381 = vrot.lane.b32.xlu0 %v306, 16
    %v382 = vpop.permute.xlu0 %381
    %v383 = vsel %vm371, %v382, %v306
    %384 = vrot.lane.b32.xlu0 %v320, 16
    %v385 = vpop.permute.xlu0 %384
    %v386 = vsel %vm371, %v385, %v320
    %387 = vrot.lane.b32.xlu0 %v334, 16
    %v388 = vpop.permute.xlu0 %387
    %v389 = vsel %vm371, %v388, %v334
    %390 = vrot.lane.b32.xlu0 %v348, 16
    %v391 = vpop.permute.xlu0 %390
    %v392 = vsel %vm371, %v391, %v348
    %393 = vrot.lane.b32.xlu0 %v362, 16
    %v394 = vpop.permute.xlu0 %393
    %v395 = vsel %vm371, %v394, %v362
    %396 = vrot.lane.b32.xlu0 %v374, 16
    %v397 = vpop.permute.xlu0 %396
    %398 = vrot.lane.b32.xlu0 %v377, 16
    %v399 = vpop.permute.xlu0 %398
    %400 = vrot.lane.b32.xlu0 %v380, 16
    %v401 = vpop.permute.xlu0 %400
    %402 = vrot.lane.b32.xlu0 %v383, 16
    %v403 = vpop.permute.xlu0 %402
    %404 = vrot.lane.b32.xlu0 %v386, 16
    %v405 = vpop.permute.xlu0 %404
    %406 = vrot.lane.b32.xlu0 %v389, 16
    %v407 = vpop.permute.xlu0 %406
    %408 = vrot.lane.b32.xlu0 %v392, 16
    %v409 = vpop.permute.xlu0 %408
    %410 = vrot.lane.b32.xlu0 %v395, 16
    %v411 = vpop.permute.xlu0 %410
    %v412 = vsel %vm371, %v397, %v264
    %v413 = vsel %vm371, %v399, %v278
    %v414 = vsel %vm371, %v401, %v292
    %v415 = vsel %vm371, %v403, %v306
    %v416 = vsel %vm371, %v405, %v320
    %v417 = vsel %vm371, %v407, %v334
    %v418 = vsel %vm371, %v409, %v348
    %v419 = vsel %vm371, %v411, %v362
    %428 = vrot.lane.b32.xlu0 %v412, 113
    %v429 = vpop.permute.xlu0 %428
    %430 = vrot.lane.b32.xlu0 %v413, 113
    %v431 = vpop.permute.xlu0 %430
    %432 = vrot.lane.b32.xlu0 %v414, 113
    %v433 = vpop.permute.xlu0 %432
    %434 = vrot.lane.b32.xlu0 %v415, 113
    %v435 = vpop.permute.xlu0 %434
    %436 = vrot.lane.b32.xlu0 %v416, 113
    %v437 = vpop.permute.xlu0 %436
    %438 = vrot.lane.b32.xlu0 %v417, 113
    %v439 = vpop.permute.xlu0 %438
    %440 = vrot.lane.b32.xlu0 %v418, 113
    %v441 = vpop.permute.xlu0 %440
    %442 = vrot.lane.b32.xlu0 %v419, 113
    %v443 = vpop.permute.xlu0 %442
    %v452 = vsel %vm39, %v429, %v264
    %v453 = vsel %vm39, %v431, %v278
    %v454 = vsel %vm39, %v433, %v292
    %v455 = vsel %vm39, %v435, %v306
    %v456 = vsel %vm39, %v437, %v320
    %v457 = vsel %vm39, %v439, %v334
    %v458 = vsel %vm39, %v441, %v348
    %v459 = vsel %vm39, %v443, %v362
    %460 = vrot.lane.b32.xlu0 %v412, 127
    %v461 = vpop.permute.xlu0 %460
    %462 = vrot.lane.b32.xlu0 %v413, 127
    %v463 = vpop.permute.xlu0 %462
    %464 = vrot.lane.b32.xlu0 %v414, 127
    %v465 = vpop.permute.xlu0 %464
    %466 = vrot.lane.b32.xlu0 %v415, 127
    %v467 = vpop.permute.xlu0 %466
    %468 = vrot.lane.b32.xlu0 %v416, 127
    %v469 = vpop.permute.xlu0 %468
    %470 = vrot.lane.b32.xlu0 %v417, 127
    %v471 = vpop.permute.xlu0 %470
    %472 = vrot.lane.b32.xlu0 %v418, 127
    %v473 = vpop.permute.xlu0 %472
    %474 = vrot.lane.b32.xlu0 %v419, 127
    %v475 = vpop.permute.xlu0 %474
    %v484 = vsel %vm36, %v461, %v452
    %v485 = vsel %vm36, %v463, %v453
    %v486 = vsel %vm36, %v465, %v454
    %v487 = vsel %vm36, %v467, %v455
    %v488 = vsel %vm36, %v469, %v456
    %v489 = vsel %vm36, %v471, %v457
    %v490 = vsel %vm36, %v473, %v458
    %v491 = vsel %vm36, %v475, %v459
    %492 = vrot.lane.b32.xlu0 %v484, 16
    %v493 = vpop.permute.xlu0 %492
    %v494 = vsel %vm371, %v493, %v484
    %495 = vrot.lane.b32.xlu0 %v485, 16
    %v496 = vpop.permute.xlu0 %495
    %v497 = vsel %vm371, %v496, %v485
    %498 = vrot.lane.b32.xlu0 %v486, 16
    %v499 = vpop.permute.xlu0 %498
    %v500 = vsel %vm371, %v499, %v486
    %501 = vrot.lane.b32.xlu0 %v487, 16
    %v502 = vpop.permute.xlu0 %501
    %v503 = vsel %vm371, %v502, %v487
    %504 = vrot.lane.b32.xlu0 %v488, 16
    %v505 = vpop.permute.xlu0 %504
    %v506 = vsel %vm371, %v505, %v488
    %507 = vrot.lane.b32.xlu0 %v489, 16
    %v508 = vpop.permute.xlu0 %507
    %v509 = vsel %vm371, %v508, %v489
    %510 = vrot.lane.b32.xlu0 %v490, 16
    %v511 = vpop.permute.xlu0 %510
    %v512 = vsel %vm371, %v511, %v490
    %513 = vrot.lane.b32.xlu0 %v491, 16
    %v514 = vpop.permute.xlu0 %513
    %v515 = vsel %vm371, %v514, %v491
    %516 = vrot.lane.b32.xlu0 %v494, 16
    %v517 = vpop.permute.xlu0 %516
    %518 = vrot.lane.b32.xlu0 %v497, 16
    %v519 = vpop.permute.xlu0 %518
    %520 = vrot.lane.b32.xlu0 %v500, 16
    %v521 = vpop.permute.xlu0 %520
    %522 = vrot.lane.b32.xlu0 %v503, 16
    %v523 = vpop.permute.xlu0 %522
    %524 = vrot.lane.b32.xlu0 %v506, 16
    %v525 = vpop.permute.xlu0 %524
    %526 = vrot.lane.b32.xlu0 %v509, 16
    %v527 = vpop.permute.xlu0 %526
    %528 = vrot.lane.b32.xlu0 %v512, 16
    %v529 = vpop.permute.xlu0 %528
    %530 = vrot.lane.b32.xlu0 %v515, 16
    %v531 = vpop.permute.xlu0 %530
    %v532 = vsel %vm371, %v517, %v484
    %v533 = vsel %vm371, %v519, %v485
    %v534 = vsel %vm371, %v521, %v486
    %v535 = vsel %vm371, %v523, %v487
    %v536 = vsel %vm371, %v525, %v488
    %v537 = vsel %vm371, %v527, %v489
    %v538 = vsel %vm371, %v529, %v490
    %v539 = vsel %vm371, %v531, %v491
    %548 = vrot.lane.b32.xlu0 %v532, 114
    %v549 = vpop.permute.xlu0 %548
    %550 = vrot.lane.b32.xlu0 %v533, 114
    %v551 = vpop.permute.xlu0 %550
    %552 = vrot.lane.b32.xlu0 %v534, 114
    %v553 = vpop.permute.xlu0 %552
    %554 = vrot.lane.b32.xlu0 %v535, 114
    %v555 = vpop.permute.xlu0 %554
    %556 = vrot.lane.b32.xlu0 %v536, 114
    %v557 = vpop.permute.xlu0 %556
    %558 = vrot.lane.b32.xlu0 %v537, 114
    %v559 = vpop.permute.xlu0 %558
    %560 = vrot.lane.b32.xlu0 %v538, 114
    %v561 = vpop.permute.xlu0 %560
    %562 = vrot.lane.b32.xlu0 %v539, 114
    %v563 = vpop.permute.xlu0 %562
    %v572 = vsel %vm45, %v549, %v484
    %v573 = vsel %vm45, %v551, %v485
    %v574 = vsel %vm45, %v553, %v486
    %v575 = vsel %vm45, %v555, %v487
    %v576 = vsel %vm45, %v557, %v488
    %v577 = vsel %vm45, %v559, %v489
    %v578 = vsel %vm45, %v561, %v490
    %v579 = vsel %vm45, %v563, %v491
    %580 = vrot.lane.b32.xlu0 %v532, 126
    %v581 = vpop.permute.xlu0 %580
    %582 = vrot.lane.b32.xlu0 %v533, 126
    %v583 = vpop.permute.xlu0 %582
    %584 = vrot.lane.b32.xlu0 %v534, 126
    %v585 = vpop.permute.xlu0 %584
    %586 = vrot.lane.b32.xlu0 %v535, 126
    %v587 = vpop.permute.xlu0 %586
    %588 = vrot.lane.b32.xlu0 %v536, 126
    %v589 = vpop.permute.xlu0 %588
    %590 = vrot.lane.b32.xlu0 %v537, 126
    %v591 = vpop.permute.xlu0 %590
    %592 = vrot.lane.b32.xlu0 %v538, 126
    %v593 = vpop.permute.xlu0 %592
    %594 = vrot.lane.b32.xlu0 %v539, 126
    %v595 = vpop.permute.xlu0 %594
    %v604 = vsel %vm43, %v581, %v572
    %v605 = vsel %vm43, %v583, %v573
    %v606 = vsel %vm43, %v585, %v574
    %v607 = vsel %vm43, %v587, %v575
    %v608 = vsel %vm43, %v589, %v576
    %v609 = vsel %vm43, %v591, %v577
    %v610 = vsel %vm43, %v593, %v578
    %v611 = vsel %vm43, %v595, %v579
    %612 = vrot.lane.b32.xlu0 %v604, 16
    %v613 = vpop.permute.xlu0 %612
    %v614 = vsel %vm371, %v613, %v604
    %615 = vrot.lane.b32.xlu0 %v605, 16
    %v616 = vpop.permute.xlu0 %615
    %v617 = vsel %vm371, %v616, %v605
    %618 = vrot.lane.b32.xlu0 %v606, 16
    %v619 = vpop.permute.xlu0 %618
    %v620 = vsel %vm371, %v619, %v606
    %621 = vrot.lane.b32.xlu0 %v607, 16
    %v622 = vpop.permute.xlu0 %621
    %v623 = vsel %vm371, %v622, %v607
    %624 = vrot.lane.b32.xlu0 %v608, 16
    %v625 = vpop.permute.xlu0 %624
    %v626 = vsel %vm371, %v625, %v608
    %627 = vrot.lane.b32.xlu0 %v609, 16
    %v628 = vpop.permute.xlu0 %627
    %v629 = vsel %vm371, %v628, %v609
    %630 = vrot.lane.b32.xlu0 %v610, 16
    %v631 = vpop.permute.xlu0 %630
    %v632 = vsel %vm371, %v631, %v610
    %633 = vrot.lane.b32.xlu0 %v611, 16
    %v634 = vpop.permute.xlu0 %633
    %v635 = vsel %vm371, %v634, %v611
    %636 = vrot.lane.b32.xlu0 %v614, 16
    %v637 = vpop.permute.xlu0 %636
    %638 = vrot.lane.b32.xlu0 %v617, 16
    %v639 = vpop.permute.xlu0 %638
    %640 = vrot.lane.b32.xlu0 %v620, 16
    %v641 = vpop.permute.xlu0 %640
    %642 = vrot.lane.b32.xlu0 %v623, 16
    %v643 = vpop.permute.xlu0 %642
    %644 = vrot.lane.b32.xlu0 %v626, 16
    %v645 = vpop.permute.xlu0 %644
    %646 = vrot.lane.b32.xlu0 %v629, 16
    %v647 = vpop.permute.xlu0 %646
    %648 = vrot.lane.b32.xlu0 %v632, 16
    %v649 = vpop.permute.xlu0 %648
    %650 = vrot.lane.b32.xlu0 %v635, 16
    %v651 = vpop.permute.xlu0 %650
    %v652 = vsel %vm371, %v637, %v604
    %v653 = vsel %vm371, %v639, %v605
    %v654 = vsel %vm371, %v641, %v606
    %v655 = vsel %vm371, %v643, %v607
    %v656 = vsel %vm371, %v645, %v608
    %v657 = vsel %vm371, %v647, %v609
    %v658 = vsel %vm371, %v649, %v610
    %v659 = vsel %vm371, %v651, %v611
    %668 = vrot.lane.b32.xlu0 %v652, 116
    %v669 = vpop.permute.xlu0 %668
    %670 = vrot.lane.b32.xlu0 %v653, 116
    %v671 = vpop.permute.xlu0 %670
    %672 = vrot.lane.b32.xlu0 %v654, 116
    %v673 = vpop.permute.xlu0 %672
    %674 = vrot.lane.b32.xlu0 %v655, 116
    %v675 = vpop.permute.xlu0 %674
    %676 = vrot.lane.b32.xlu0 %v656, 116
    %v677 = vpop.permute.xlu0 %676
    %678 = vrot.lane.b32.xlu0 %v657, 116
    %v679 = vpop.permute.xlu0 %678
    %680 = vrot.lane.b32.xlu0 %v658, 116
    %v681 = vpop.permute.xlu0 %680
    %682 = vrot.lane.b32.xlu0 %v659, 116
    %v683 = vpop.permute.xlu0 %682
    %v692 = vsel %vm51, %v669, %v604
    %v693 = vsel %vm51, %v671, %v605
    %v694 = vsel %vm51, %v673, %v606
    %v695 = vsel %vm51, %v675, %v607
    %v696 = vsel %vm51, %v677, %v608
    %v697 = vsel %vm51, %v679, %v609
    %v698 = vsel %vm51, %v681, %v610
    %v699 = vsel %vm51, %v683, %v611
    %700 = vrot.lane.b32.xlu0 %v652, 124
    %v701 = vpop.permute.xlu0 %700
    %702 = vrot.lane.b32.xlu0 %v653, 124
    %v703 = vpop.permute.xlu0 %702
    %704 = vrot.lane.b32.xlu0 %v654, 124
    %v705 = vpop.permute.xlu0 %704
    %706 = vrot.lane.b32.xlu0 %v655, 124
    %v707 = vpop.permute.xlu0 %706
    %708 = vrot.lane.b32.xlu0 %v656, 124
    %v709 = vpop.permute.xlu0 %708
    %710 = vrot.lane.b32.xlu0 %v657, 124
    %v711 = vpop.permute.xlu0 %710
    %712 = vrot.lane.b32.xlu0 %v658, 124
    %v713 = vpop.permute.xlu0 %712
    %714 = vrot.lane.b32.xlu0 %v659, 124
    %v715 = vpop.permute.xlu0 %714
    %v724 = vsel %vm49, %v701, %v692
    %v725 = vsel %vm49, %v703, %v693
    %v726 = vsel %vm49, %v705, %v694
    %v727 = vsel %vm49, %v707, %v695
    %v728 = vsel %vm49, %v709, %v696
    %v729 = vsel %vm49, %v711, %v697
    %v730 = vsel %vm49, %v713, %v698
    %v731 = vsel %vm49, %v715, %v699
    %732 = vrot.lane.b32.xlu0 %v724, 16
    %v733 = vpop.permute.xlu0 %732
    %v734 = vsel %vm371, %v733, %v724
    %735 = vrot.lane.b32.xlu0 %v725, 16
    %v736 = vpop.permute.xlu0 %735
    %v737 = vsel %vm371, %v736, %v725
    %738 = vrot.lane.b32.xlu0 %v726, 16
    %v739 = vpop.permute.xlu0 %738
    %v740 = vsel %vm371, %v739, %v726
    %741 = vrot.lane.b32.xlu0 %v727, 16
    %v742 = vpop.permute.xlu0 %741
    %v743 = vsel %vm371, %v742, %v727
    %744 = vrot.lane.b32.xlu0 %v728, 16
    %v745 = vpop.permute.xlu0 %744
    %v746 = vsel %vm371, %v745, %v728
    %747 = vrot.lane.b32.xlu0 %v729, 16
    %v748 = vpop.permute.xlu0 %747
    %v749 = vsel %vm371, %v748, %v729
    %750 = vrot.lane.b32.xlu0 %v730, 16
    %v751 = vpop.permute.xlu0 %750
    %v752 = vsel %vm371, %v751, %v730
    %753 = vrot.lane.b32.xlu0 %v731, 16
    %v754 = vpop.permute.xlu0 %753
    %v755 = vsel %vm371, %v754, %v731
    %756 = vrot.lane.b32.xlu0 %v734, 16
    %v757 = vpop.permute.xlu0 %756
    %758 = vrot.lane.b32.xlu0 %v737, 16
    %v759 = vpop.permute.xlu0 %758
    %760 = vrot.lane.b32.xlu0 %v740, 16
    %v761 = vpop.permute.xlu0 %760
    %762 = vrot.lane.b32.xlu0 %v743, 16
    %v763 = vpop.permute.xlu0 %762
    %764 = vrot.lane.b32.xlu0 %v746, 16
    %v765 = vpop.permute.xlu0 %764
    %766 = vrot.lane.b32.xlu0 %v749, 16
    %v767 = vpop.permute.xlu0 %766
    %768 = vrot.lane.b32.xlu0 %v752, 16
    %v769 = vpop.permute.xlu0 %768
    %770 = vrot.lane.b32.xlu0 %v755, 16
    %v771 = vpop.permute.xlu0 %770
    %v772 = vsel %vm371, %v757, %v724
    %v773 = vsel %vm371, %v759, %v725
    %v774 = vsel %vm371, %v761, %v726
    %v775 = vsel %vm371, %v763, %v727
    %v776 = vsel %vm371, %v765, %v728
    %v777 = vsel %vm371, %v767, %v729
    %v778 = vsel %vm371, %v769, %v730
    %v779 = vsel %vm371, %v771, %v731
    %v844 = vrot.slane %v117, 7
    %v845 = vsel %vm245, %v844, %v116
    %v846 = vrot.slane %v118, 6
    %v847 = vsel %vm248, %v846, %v845
    %v848 = vrot.slane %v119, 5
    %v849 = vsel %vm251, %v848, %v847
    %v850 = vrot.slane %v120, 4
    %v851 = vsel %vm254, %v850, %v849
    %v852 = vrot.slane %v121, 3
    %v853 = vsel %vm257, %v852, %v851
    %v854 = vrot.slane %v122, 2
    %v855 = vsel %vm260, %v854, %v853
    %v856 = vrot.slane %v123, 1
    %v857 = vsel %vm263, %v856, %v855
    %v858 = vrot.slane %v125, 7
    %v859 = vsel %vm245, %v858, %v124
    %v860 = vrot.slane %v126, 6
    %v861 = vsel %vm248, %v860, %v859
    %v862 = vrot.slane %v127, 5
    %v863 = vsel %vm251, %v862, %v861
    %v864 = vrot.slane %v128, 4
    %v865 = vsel %vm254, %v864, %v863
    %v866 = vrot.slane %v129, 3
    %v867 = vsel %vm257, %v866, %v865
    %v868 = vrot.slane %v130, 2
    %v869 = vsel %vm260, %v868, %v867
    %v870 = vrot.slane %v131, 1
    %v871 = vsel %vm263, %v870, %v869
    %v872 = vrot.slane %v133, 7
    %v873 = vsel %vm245, %v872, %v132
    %v874 = vrot.slane %v134, 6
    %v875 = vsel %vm248, %v874, %v873
    %v876 = vrot.slane %v135, 5
    %v877 = vsel %vm251, %v876, %v875
    %v878 = vrot.slane %v136, 4
    %v879 = vsel %vm254, %v878, %v877
    %v880 = vrot.slane %v137, 3
    %v881 = vsel %vm257, %v880, %v879
    %v882 = vrot.slane %v138, 2
    %v883 = vsel %vm260, %v882, %v881
    %v884 = vrot.slane %v139, 1
    %v885 = vsel %vm263, %v884, %v883
    %v886 = vrot.slane %v141, 7
    %v887 = vsel %vm245, %v886, %v140
    %v888 = vrot.slane %v142, 6
    %v889 = vsel %vm248, %v888, %v887
    %v890 = vrot.slane %v143, 5
    %v891 = vsel %vm251, %v890, %v889
    %v892 = vrot.slane %v144, 4
    %v893 = vsel %vm254, %v892, %v891
    %v894 = vrot.slane %v145, 3
    %v895 = vsel %vm257, %v894, %v893
    %v896 = vrot.slane %v146, 2
    %v897 = vsel %vm260, %v896, %v895
    %v898 = vrot.slane %v147, 1
    %v899 = vsel %vm263, %v898, %v897
    %v900 = vrot.slane %v149, 7
    %v901 = vsel %vm245, %v900, %v148
    %v902 = vrot.slane %v150, 6
    %v903 = vsel %vm248, %v902, %v901
    %v904 = vrot.slane %v151, 5
    %v905 = vsel %vm251, %v904, %v903
    %v906 = vrot.slane %v152, 4
    %v907 = vsel %vm254, %v906, %v905
    %v908 = vrot.slane %v153, 3
    %v909 = vsel %vm257, %v908, %v907
    %v910 = vrot.slane %v154, 2
    %v911 = vsel %vm260, %v910, %v909
    %v912 = vrot.slane %v155, 1
    %v913 = vsel %vm263, %v912, %v911
    %v914 = vrot.slane %v157, 7
    %v915 = vsel %vm245, %v914, %v156
    %v916 = vrot.slane %v158, 6
    %v917 = vsel %vm248, %v916, %v915
    %v918 = vrot.slane %v159, 5
    %v919 = vsel %vm251, %v918, %v917
    %v920 = vrot.slane %v160, 4
    %v921 = vsel %vm254, %v920, %v919
    %v922 = vrot.slane %v161, 3
    %v923 = vsel %vm257, %v922, %v921
    %v924 = vrot.slane %v162, 2
    %v925 = vsel %vm260, %v924, %v923
    %v926 = vrot.slane %v163, 1
    %v927 = vsel %vm263, %v926, %v925
    %v928 = vrot.slane %v165, 7
    %v929 = vsel %vm245, %v928, %v164
    %v930 = vrot.slane %v166, 6
    %v931 = vsel %vm248, %v930, %v929
    %v932 = vrot.slane %v167, 5
    %v933 = vsel %vm251, %v932, %v931
    %v934 = vrot.slane %v168, 4
    %v935 = vsel %vm254, %v934, %v933
    %v936 = vrot.slane %v169, 3
    %v937 = vsel %vm257, %v936, %v935
    %v938 = vrot.slane %v170, 2
    %v939 = vsel %vm260, %v938, %v937
    %v940 = vrot.slane %v171, 1
    %v941 = vsel %vm263, %v940, %v939
    %v942 = vrot.slane %v173, 7
    %v943 = vsel %vm245, %v942, %v172
    %v944 = vrot.slane %v174, 6
    %v945 = vsel %vm248, %v944, %v943
    %v946 = vrot.slane %v175, 5
    %v947 = vsel %vm251, %v946, %v945
    %v948 = vrot.slane %v176, 4
    %v949 = vsel %vm254, %v948, %v947
    %v950 = vrot.slane %v177, 3
    %v951 = vsel %vm257, %v950, %v949
    %v952 = vrot.slane %v178, 2
    %v953 = vsel %vm260, %v952, %v951
    %v954 = vrot.slane %v179, 1
    %v955 = vsel %vm263, %v954, %v953
    %964 = vrot.lane.b32.xlu0 %v857, 16
    %v965 = vpop.permute.xlu0 %964
    %v966 = vsel %vm371, %v965, %v857
    %967 = vrot.lane.b32.xlu0 %v871, 16
    %v968 = vpop.permute.xlu0 %967
    %v969 = vsel %vm371, %v968, %v871
    %970 = vrot.lane.b32.xlu0 %v885, 16
    %v971 = vpop.permute.xlu0 %970
    %v972 = vsel %vm371, %v971, %v885
    %973 = vrot.lane.b32.xlu0 %v899, 16
    %v974 = vpop.permute.xlu0 %973
    %v975 = vsel %vm371, %v974, %v899
    %976 = vrot.lane.b32.xlu0 %v913, 16
    %v977 = vpop.permute.xlu0 %976
    %v978 = vsel %vm371, %v977, %v913
    %979 = vrot.lane.b32.xlu0 %v927, 16
    %v980 = vpop.permute.xlu0 %979
    %v981 = vsel %vm371, %v980, %v927
    %982 = vrot.lane.b32.xlu0 %v941, 16
    %v983 = vpop.permute.xlu0 %982
    %v984 = vsel %vm371, %v983, %v941
    %985 = vrot.lane.b32.xlu0 %v955, 16
    %v986 = vpop.permute.xlu0 %985
    %v987 = vsel %vm371, %v986, %v955
    %988 = vrot.lane.b32.xlu0 %v966, 16
    %v989 = vpop.permute.xlu0 %988
    %990 = vrot.lane.b32.xlu0 %v969, 16
    %v991 = vpop.permute.xlu0 %990
    %992 = vrot.lane.b32.xlu0 %v972, 16
    %v993 = vpop.permute.xlu0 %992
    %994 = vrot.lane.b32.xlu0 %v975, 16
    %v995 = vpop.permute.xlu0 %994
    %996 = vrot.lane.b32.xlu0 %v978, 16
    %v997 = vpop.permute.xlu0 %996
    %998 = vrot.lane.b32.xlu0 %v981, 16
    %v999 = vpop.permute.xlu0 %998
    %1000 = vrot.lane.b32.xlu0 %v984, 16
    %v1001 = vpop.permute.xlu0 %1000
    %1002 = vrot.lane.b32.xlu0 %v987, 16
    %v1003 = vpop.permute.xlu0 %1002
    %v1004 = vsel %vm371, %v989, %v857
    %v1005 = vsel %vm371, %v991, %v871
    %v1006 = vsel %vm371, %v993, %v885
    %v1007 = vsel %vm371, %v995, %v899
    %v1008 = vsel %vm371, %v997, %v913
    %v1009 = vsel %vm371, %v999, %v927
    %v1010 = vsel %vm371, %v1001, %v941
    %v1011 = vsel %vm371, %v1003, %v955
    %1020 = vrot.lane.b32.xlu0 %v1004, 113
    %v1021 = vpop.permute.xlu0 %1020
    %1022 = vrot.lane.b32.xlu0 %v1005, 113
    %v1023 = vpop.permute.xlu0 %1022
    %1024 = vrot.lane.b32.xlu0 %v1006, 113
    %v1025 = vpop.permute.xlu0 %1024
    %1026 = vrot.lane.b32.xlu0 %v1007, 113
    %v1027 = vpop.permute.xlu0 %1026
    %1028 = vrot.lane.b32.xlu0 %v1008, 113
    %v1029 = vpop.permute.xlu0 %1028
    %1030 = vrot.lane.b32.xlu0 %v1009, 113
    %v1031 = vpop.permute.xlu0 %1030
    %1032 = vrot.lane.b32.xlu0 %v1010, 113
    %v1033 = vpop.permute.xlu0 %1032
    %1034 = vrot.lane.b32.xlu0 %v1011, 113
    %v1035 = vpop.permute.xlu0 %1034
    %v1044 = vsel %vm39, %v1021, %v857
    %v1045 = vsel %vm39, %v1023, %v871
    %v1046 = vsel %vm39, %v1025, %v885
    %v1047 = vsel %vm39, %v1027, %v899
    %v1048 = vsel %vm39, %v1029, %v913
    %v1049 = vsel %vm39, %v1031, %v927
    %v1050 = vsel %vm39, %v1033, %v941
    %v1051 = vsel %vm39, %v1035, %v955
    %1052 = vrot.lane.b32.xlu0 %v1004, 127
    %v1053 = vpop.permute.xlu0 %1052
    %1054 = vrot.lane.b32.xlu0 %v1005, 127
    %v1055 = vpop.permute.xlu0 %1054
    %1056 = vrot.lane.b32.xlu0 %v1006, 127
    %v1057 = vpop.permute.xlu0 %1056
    %1058 = vrot.lane.b32.xlu0 %v1007, 127
    %v1059 = vpop.permute.xlu0 %1058
    %1060 = vrot.lane.b32.xlu0 %v1008, 127
    %v1061 = vpop.permute.xlu0 %1060
    %1062 = vrot.lane.b32.xlu0 %v1009, 127
    %v1063 = vpop.permute.xlu0 %1062
    %1064 = vrot.lane.b32.xlu0 %v1010, 127
    %v1065 = vpop.permute.xlu0 %1064
    %1066 = vrot.lane.b32.xlu0 %v1011, 127
    %v1067 = vpop.permute.xlu0 %1066
    %v1076 = vsel %vm36, %v1053, %v1044
    %v1077 = vsel %vm36, %v1055, %v1045
    %v1078 = vsel %vm36, %v1057, %v1046
    %v1079 = vsel %vm36, %v1059, %v1047
    %v1080 = vsel %vm36, %v1061, %v1048
    %v1081 = vsel %vm36, %v1063, %v1049
    %v1082 = vsel %vm36, %v1065, %v1050
    %v1083 = vsel %vm36, %v1067, %v1051
    %1084 = vrot.lane.b32.xlu0 %v1076, 16
    %v1085 = vpop.permute.xlu0 %1084
    %v1086 = vsel %vm371, %v1085, %v1076
    %1087 = vrot.lane.b32.xlu0 %v1077, 16
    %v1088 = vpop.permute.xlu0 %1087
    %v1089 = vsel %vm371, %v1088, %v1077
    %1090 = vrot.lane.b32.xlu0 %v1078, 16
    %v1091 = vpop.permute.xlu0 %1090
    %v1092 = vsel %vm371, %v1091, %v1078
    %1093 = vrot.lane.b32.xlu0 %v1079, 16
    %v1094 = vpop.permute.xlu0 %1093
    %v1095 = vsel %vm371, %v1094, %v1079
    %1096 = vrot.lane.b32.xlu0 %v1080, 16
    %v1097 = vpop.permute.xlu0 %1096
    %v1098 = vsel %vm371, %v1097, %v1080
    %1099 = vrot.lane.b32.xlu0 %v1081, 16
    %v1100 = vpop.permute.xlu0 %1099
    %v1101 = vsel %vm371, %v1100, %v1081
    %1102 = vrot.lane.b32.xlu0 %v1082, 16
    %v1103 = vpop.permute.xlu0 %1102
    %v1104 = vsel %vm371, %v1103, %v1082
    %1105 = vrot.lane.b32.xlu0 %v1083, 16
    %v1106 = vpop.permute.xlu0 %1105
    %v1107 = vsel %vm371, %v1106, %v1083
    %1108 = vrot.lane.b32.xlu0 %v1086, 16
    %v1109 = vpop.permute.xlu0 %1108
    %1110 = vrot.lane.b32.xlu0 %v1089, 16
    %v1111 = vpop.permute.xlu0 %1110
    %1112 = vrot.lane.b32.xlu0 %v1092, 16
    %v1113 = vpop.permute.xlu0 %1112
    %1114 = vrot.lane.b32.xlu0 %v1095, 16
    %v1115 = vpop.permute.xlu0 %1114
    %1116 = vrot.lane.b32.xlu0 %v1098, 16
    %v1117 = vpop.permute.xlu0 %1116
    %1118 = vrot.lane.b32.xlu0 %v1101, 16
    %v1119 = vpop.permute.xlu0 %1118
    %1120 = vrot.lane.b32.xlu0 %v1104, 16
    %v1121 = vpop.permute.xlu0 %1120
    %1122 = vrot.lane.b32.xlu0 %v1107, 16
    %v1123 = vpop.permute.xlu0 %1122
    %v1124 = vsel %vm371, %v1109, %v1076
    %v1125 = vsel %vm371, %v1111, %v1077
    %v1126 = vsel %vm371, %v1113, %v1078
    %v1127 = vsel %vm371, %v1115, %v1079
    %v1128 = vsel %vm371, %v1117, %v1080
    %v1129 = vsel %vm371, %v1119, %v1081
    %v1130 = vsel %vm371, %v1121, %v1082
    %v1131 = vsel %vm371, %v1123, %v1083
    %1140 = vrot.lane.b32.xlu0 %v1124, 114
    %v1141 = vpop.permute.xlu0 %1140
    %1142 = vrot.lane.b32.xlu0 %v1125, 114
    %v1143 = vpop.permute.xlu0 %1142
    %1144 = vrot.lane.b32.xlu0 %v1126, 114
    %v1145 = vpop.permute.xlu0 %1144
    %1146 = vrot.lane.b32.xlu0 %v1127, 114
    %v1147 = vpop.permute.xlu0 %1146
    %1148 = vrot.lane.b32.xlu0 %v1128, 114
    %v1149 = vpop.permute.xlu0 %1148
    %1150 = vrot.lane.b32.xlu0 %v1129, 114
    %v1151 = vpop.permute.xlu0 %1150
    %1152 = vrot.lane.b32.xlu0 %v1130, 114
    %v1153 = vpop.permute.xlu0 %1152
    %1154 = vrot.lane.b32.xlu0 %v1131, 114
    %v1155 = vpop.permute.xlu0 %1154
    %v1164 = vsel %vm45, %v1141, %v1076
    %v1165 = vsel %vm45, %v1143, %v1077
    %v1166 = vsel %vm45, %v1145, %v1078
    %v1167 = vsel %vm45, %v1147, %v1079
    %v1168 = vsel %vm45, %v1149, %v1080
    %v1169 = vsel %vm45, %v1151, %v1081
    %v1170 = vsel %vm45, %v1153, %v1082
    %v1171 = vsel %vm45, %v1155, %v1083
    %1172 = vrot.lane.b32.xlu0 %v1124, 126
    %v1173 = vpop.permute.xlu0 %1172
    %1174 = vrot.lane.b32.xlu0 %v1125, 126
    %v1175 = vpop.permute.xlu0 %1174
    %1176 = vrot.lane.b32.xlu0 %v1126, 126
    %v1177 = vpop.permute.xlu0 %1176
    %1178 = vrot.lane.b32.xlu0 %v1127, 126
    %v1179 = vpop.permute.xlu0 %1178
    %1180 = vrot.lane.b32.xlu0 %v1128, 126
    %v1181 = vpop.permute.xlu0 %1180
    %1182 = vrot.lane.b32.xlu0 %v1129, 126
    %v1183 = vpop.permute.xlu0 %1182
    %1184 = vrot.lane.b32.xlu0 %v1130, 126
    %v1185 = vpop.permute.xlu0 %1184
    %1186 = vrot.lane.b32.xlu0 %v1131, 126
    %v1187 = vpop.permute.xlu0 %1186
    %v1196 = vsel %vm43, %v1173, %v1164
    %v1197 = vsel %vm43, %v1175, %v1165
    %v1198 = vsel %vm43, %v1177, %v1166
    %v1199 = vsel %vm43, %v1179, %v1167
    %v1200 = vsel %vm43, %v1181, %v1168
    %v1201 = vsel %vm43, %v1183, %v1169
    %v1202 = vsel %vm43, %v1185, %v1170
    %v1203 = vsel %vm43, %v1187, %v1171
    %1204 = vrot.lane.b32.xlu0 %v1196, 16
    %v1205 = vpop.permute.xlu0 %1204
    %v1206 = vsel %vm371, %v1205, %v1196
    %1207 = vrot.lane.b32.xlu0 %v1197, 16
    %v1208 = vpop.permute.xlu0 %1207
    %v1209 = vsel %vm371, %v1208, %v1197
    %1210 = vrot.lane.b32.xlu0 %v1198, 16
    %v1211 = vpop.permute.xlu0 %1210
    %v1212 = vsel %vm371, %v1211, %v1198
    %1213 = vrot.lane.b32.xlu0 %v1199, 16
    %v1214 = vpop.permute.xlu0 %1213
    %v1215 = vsel %vm371, %v1214, %v1199
    %1216 = vrot.lane.b32.xlu0 %v1200, 16
    %v1217 = vpop.permute.xlu0 %1216
    %v1218 = vsel %vm371, %v1217, %v1200
    %1219 = vrot.lane.b32.xlu0 %v1201, 16
    %v1220 = vpop.permute.xlu0 %1219
    %v1221 = vsel %vm371, %v1220, %v1201
    %1222 = vrot.lane.b32.xlu0 %v1202, 16
    %v1223 = vpop.permute.xlu0 %1222
    %v1224 = vsel %vm371, %v1223, %v1202
    %1225 = vrot.lane.b32.xlu0 %v1203, 16
    %v1226 = vpop.permute.xlu0 %1225
    %v1227 = vsel %vm371, %v1226, %v1203
    %1228 = vrot.lane.b32.xlu0 %v1206, 16
    %v1229 = vpop.permute.xlu0 %1228
    %1230 = vrot.lane.b32.xlu0 %v1209, 16
    %v1231 = vpop.permute.xlu0 %1230
    %1232 = vrot.lane.b32.xlu0 %v1212, 16
    %v1233 = vpop.permute.xlu0 %1232
    %1234 = vrot.lane.b32.xlu0 %v1215, 16
    %v1235 = vpop.permute.xlu0 %1234
    %1236 = vrot.lane.b32.xlu0 %v1218, 16
    %v1237 = vpop.permute.xlu0 %1236
    %1238 = vrot.lane.b32.xlu0 %v1221, 16
    %v1239 = vpop.permute.xlu0 %1238
    %1240 = vrot.lane.b32.xlu0 %v1224, 16
    %v1241 = vpop.permute.xlu0 %1240
    %1242 = vrot.lane.b32.xlu0 %v1227, 16
    %v1243 = vpop.permute.xlu0 %1242
    %v1244 = vsel %vm371, %v1229, %v1196
    %v1245 = vsel %vm371, %v1231, %v1197
    %v1246 = vsel %vm371, %v1233, %v1198
    %v1247 = vsel %vm371, %v1235, %v1199
    %v1248 = vsel %vm371, %v1237, %v1200
    %v1249 = vsel %vm371, %v1239, %v1201
    %v1250 = vsel %vm371, %v1241, %v1202
    %v1251 = vsel %vm371, %v1243, %v1203
    %1260 = vrot.lane.b32.xlu0 %v1244, 116
    %v1261 = vpop.permute.xlu0 %1260
    %1262 = vrot.lane.b32.xlu0 %v1245, 116
    %v1263 = vpop.permute.xlu0 %1262
    %1264 = vrot.lane.b32.xlu0 %v1246, 116
    %v1265 = vpop.permute.xlu0 %1264
    %1266 = vrot.lane.b32.xlu0 %v1247, 116
    %v1267 = vpop.permute.xlu0 %1266
    %1268 = vrot.lane.b32.xlu0 %v1248, 116
    %v1269 = vpop.permute.xlu0 %1268
    %1270 = vrot.lane.b32.xlu0 %v1249, 116
    %v1271 = vpop.permute.xlu0 %1270
    %1272 = vrot.lane.b32.xlu0 %v1250, 116
    %v1273 = vpop.permute.xlu0 %1272
    %1274 = vrot.lane.b32.xlu0 %v1251, 116
    %v1275 = vpop.permute.xlu0 %1274
    %v1284 = vsel %vm51, %v1261, %v1196
    %v1285 = vsel %vm51, %v1263, %v1197
    %v1286 = vsel %vm51, %v1265, %v1198
    %v1287 = vsel %vm51, %v1267, %v1199
    %v1288 = vsel %vm51, %v1269, %v1200
    %v1289 = vsel %vm51, %v1271, %v1201
    %v1290 = vsel %vm51, %v1273, %v1202
    %v1291 = vsel %vm51, %v1275, %v1203
    %1292 = vrot.lane.b32.xlu0 %v1244, 124
    %v1293 = vpop.permute.xlu0 %1292
    %1294 = vrot.lane.b32.xlu0 %v1245, 124
    %v1295 = vpop.permute.xlu0 %1294
    %1296 = vrot.lane.b32.xlu0 %v1246, 124
    %v1297 = vpop.permute.xlu0 %1296
    %1298 = vrot.lane.b32.xlu0 %v1247, 124
    %v1299 = vpop.permute.xlu0 %1298
    %1300 = vrot.lane.b32.xlu0 %v1248, 124
    %v1301 = vpop.permute.xlu0 %1300
    %1302 = vrot.lane.b32.xlu0 %v1249, 124
    %v1303 = vpop.permute.xlu0 %1302
    %1304 = vrot.lane.b32.xlu0 %v1250, 124
    %v1305 = vpop.permute.xlu0 %1304
    %1306 = vrot.lane.b32.xlu0 %v1251, 124
    %v1307 = vpop.permute.xlu0 %1306
    %v1316 = vsel %vm49, %v1293, %v1284
    %v1317 = vsel %vm49, %v1295, %v1285
    %v1318 = vsel %vm49, %v1297, %v1286
    %v1319 = vsel %vm49, %v1299, %v1287
    %v1320 = vsel %vm49, %v1301, %v1288
    %v1321 = vsel %vm49, %v1303, %v1289
    %v1322 = vsel %vm49, %v1305, %v1290
    %v1323 = vsel %vm49, %v1307, %v1291
    %1324 = vrot.lane.b32.xlu0 %v1316, 16
    %v1325 = vpop.permute.xlu0 %1324
    %v1326 = vsel %vm371, %v1325, %v1316
    %1327 = vrot.lane.b32.xlu0 %v1317, 16
    %v1328 = vpop.permute.xlu0 %1327
    %v1329 = vsel %vm371, %v1328, %v1317
    %1330 = vrot.lane.b32.xlu0 %v1318, 16
    %v1331 = vpop.permute.xlu0 %1330
    %v1332 = vsel %vm371, %v1331, %v1318
    %1333 = vrot.lane.b32.xlu0 %v1319, 16
    %v1334 = vpop.permute.xlu0 %1333
    %v1335 = vsel %vm371, %v1334, %v1319
    %1336 = vrot.lane.b32.xlu0 %v1320, 16
    %v1337 = vpop.permute.xlu0 %1336
    %v1338 = vsel %vm371, %v1337, %v1320
    %1339 = vrot.lane.b32.xlu0 %v1321, 16
    %v1340 = vpop.permute.xlu0 %1339
    %v1341 = vsel %vm371, %v1340, %v1321
    %1342 = vrot.lane.b32.xlu0 %v1322, 16
    %v1343 = vpop.permute.xlu0 %1342
    %v1344 = vsel %vm371, %v1343, %v1322
    %1345 = vrot.lane.b32.xlu0 %v1323, 16
    %v1346 = vpop.permute.xlu0 %1345
    %v1347 = vsel %vm371, %v1346, %v1323
    %1348 = vrot.lane.b32.xlu0 %v1326, 16
    %v1349 = vpop.permute.xlu0 %1348
    %1350 = vrot.lane.b32.xlu0 %v1329, 16
    %v1351 = vpop.permute.xlu0 %1350
    %1352 = vrot.lane.b32.xlu0 %v1332, 16
    %v1353 = vpop.permute.xlu0 %1352
    %1354 = vrot.lane.b32.xlu0 %v1335, 16
    %v1355 = vpop.permute.xlu0 %1354
    %1356 = vrot.lane.b32.xlu0 %v1338, 16
    %v1357 = vpop.permute.xlu0 %1356
    %1358 = vrot.lane.b32.xlu0 %v1341, 16
    %v1359 = vpop.permute.xlu0 %1358
    %1360 = vrot.lane.b32.xlu0 %v1344, 16
    %v1361 = vpop.permute.xlu0 %1360
    %1362 = vrot.lane.b32.xlu0 %v1347, 16
    %v1363 = vpop.permute.xlu0 %1362
    %v1364 = vsel %vm371, %v1349, %v1316
    %v1365 = vsel %vm371, %v1351, %v1317
    %v1366 = vsel %vm371, %v1353, %v1318
    %v1367 = vsel %vm371, %v1355, %v1319
    %v1368 = vsel %vm371, %v1357, %v1320
    %v1369 = vsel %vm371, %v1359, %v1321
    %v1370 = vsel %vm371, %v1361, %v1322
    %v1371 = vsel %vm371, %v1363, %v1323
    %v1372 = vadd.f32 %v724, %v1316
    %v1373 = vadd.f32 %v725, %v1317
    %v1374 = vadd.f32 %v726, %v1318
    %v1375 = vadd.f32 %v727, %v1319
    %v1376 = vadd.f32 %v728, %v1320
    %v1377 = vadd.f32 %v729, %v1321
    %v1378 = vadd.f32 %v730, %v1322
    %v1379 = vadd.f32 %v731, %v1323
    %v1380 = vadd.f32 %v772, %v1364
    %v1381 = vadd.f32 %v773, %v1365
    %v1382 = vadd.f32 %v774, %v1366
    %v1383 = vadd.f32 %v775, %v1367
    %v1384 = vadd.f32 %v776, %v1368
    %v1385 = vadd.f32 %v777, %v1369
    %v1386 = vadd.f32 %v778, %v1370
    %v1387 = vadd.f32 %v779, %v1371
    %v1388 = vsub.f32 %v1316, %v724
    %v1389 = vsub.f32 %v1317, %v725
    %v1390 = vsub.f32 %v1318, %v726
    %v1391 = vsub.f32 %v1319, %v727
    %v1392 = vsub.f32 %v1320, %v728
    %v1393 = vsub.f32 %v1321, %v729
    %v1394 = vsub.f32 %v1322, %v730
    %v1395 = vsub.f32 %v1323, %v731
    %v1396 = vsub.f32 %v1364, %v772
    %v1397 = vsub.f32 %v1365, %v773
    %v1398 = vsub.f32 %v1366, %v774
    %v1399 = vsub.f32 %v1367, %v775
    %v1400 = vsub.f32 %v1368, %v776
    %v1401 = vsub.f32 %v1369, %v777
    %v1402 = vsub.f32 %v1370, %v778
    %v1403 = vsub.f32 %v1371, %v779
    %1412 = vrot.lane.b32.xlu0 %v1380, 120
    %v1413 = vpop.permute.xlu0 %1412
    %1414 = vrot.lane.b32.xlu0 %v1381, 120
    %v1415 = vpop.permute.xlu0 %1414
    %1416 = vrot.lane.b32.xlu0 %v1382, 120
    %v1417 = vpop.permute.xlu0 %1416
    %1418 = vrot.lane.b32.xlu0 %v1383, 120
    %v1419 = vpop.permute.xlu0 %1418
    %1420 = vrot.lane.b32.xlu0 %v1384, 120
    %v1421 = vpop.permute.xlu0 %1420
    %1422 = vrot.lane.b32.xlu0 %v1385, 120
    %v1423 = vpop.permute.xlu0 %1422
    %1424 = vrot.lane.b32.xlu0 %v1386, 120
    %v1425 = vpop.permute.xlu0 %1424
    %1426 = vrot.lane.b32.xlu0 %v1387, 120
    %v1427 = vpop.permute.xlu0 %1426
    %v1436 = vadd.f32 %v1372, %v1413
    %v1437 = vadd.f32 %v1373, %v1415
    %v1438 = vadd.f32 %v1374, %v1417
    %v1439 = vadd.f32 %v1375, %v1419
    %v1440 = vadd.f32 %v1376, %v1421
    %v1441 = vadd.f32 %v1377, %v1423
    %v1442 = vadd.f32 %v1378, %v1425
    %v1443 = vadd.f32 %v1379, %v1427
    %v1444 = vmul.f32 %v1436, 0.5
    %v1445 = vmul.f32 %v1437, 0.5
    %v1446 = vmul.f32 %v1438, 0.5
    %v1447 = vmul.f32 %v1439, 0.5
    %v1448 = vmul.f32 %v1440, 0.5
    %v1449 = vmul.f32 %v1441, 0.5
    %v1450 = vmul.f32 %v1442, 0.5
    %v1451 = vmul.f32 %v1443, 0.5
    %vm1452 = vcmask 64512
    %1453 = vst.msk [vmem:[#allocation5] sm:$0xff] %vm1452, %v1444
    %1454 = vst.msk [vmem:[#allocation5 + $0x8] sm:$0xff] %vm1452, %v1445
    %1455 = vst.msk [vmem:[#allocation5 + $0x10] sm:$0xff] %vm1452, %v1446
    %1456 = vst.msk [vmem:[#allocation5 + $0x18] sm:$0xff] %vm1452, %v1447
    %1457 = vst.msk [vmem:[#allocation5 + $0x20] sm:$0xff] %vm1452, %v1448
    %1458 = vst.msk [vmem:[#allocation5 + $0x28] sm:$0xff] %vm1452, %v1449
    %1459 = vst.msk [vmem:[#allocation5 + $0x30] sm:$0xff] %vm1452, %v1450
    %1460 = vst.msk [vmem:[#allocation5 + $0x38] sm:$0xff] %vm1452, %v1451
    %1469 = vrot.lane.b32.xlu0 %v1396, 120
    %v1470 = vpop.permute.xlu0 %1469
    %1471 = vrot.lane.b32.xlu0 %v1397, 120
    %v1472 = vpop.permute.xlu0 %1471
    %1473 = vrot.lane.b32.xlu0 %v1398, 120
    %v1474 = vpop.permute.xlu0 %1473
    %1475 = vrot.lane.b32.xlu0 %v1399, 120
    %v1476 = vpop.permute.xlu0 %1475
    %1477 = vrot.lane.b32.xlu0 %v1400, 120
    %v1478 = vpop.permute.xlu0 %1477
    %1479 = vrot.lane.b32.xlu0 %v1401, 120
    %v1480 = vpop.permute.xlu0 %1479
    %1481 = vrot.lane.b32.xlu0 %v1402, 120
    %v1482 = vpop.permute.xlu0 %1481
    %1483 = vrot.lane.b32.xlu0 %v1403, 120
    %v1484 = vpop.permute.xlu0 %1483
    %v1493 = vadd.f32 %v1388, %v1470
    %v1494 = vadd.f32 %v1389, %v1472
    %v1495 = vadd.f32 %v1390, %v1474
    %v1496 = vadd.f32 %v1391, %v1476
    %v1497 = vadd.f32 %v1392, %v1478
    %v1498 = vadd.f32 %v1393, %v1480
    %v1499 = vadd.f32 %v1394, %v1482
    %v1500 = vadd.f32 %v1395, %v1484
    %v1501 = vmul.f32 %v1493, 0.5
    %v1502 = vmul.f32 %v1494, 0.5
    %v1503 = vmul.f32 %v1495, 0.5
    %v1504 = vmul.f32 %v1496, 0.5
    %v1505 = vmul.f32 %v1497, 0.5
    %v1506 = vmul.f32 %v1498, 0.5
    %v1507 = vmul.f32 %v1499, 0.5
    %v1508 = vmul.f32 %v1500, 0.5
    %1509 = vst.msk [vmem:[#allocation6] sm:$0xff] %vm1452, %v1501
    %1510 = vst.msk [vmem:[#allocation6 + $0x8] sm:$0xff] %vm1452, %v1502
    %1511 = vst.msk [vmem:[#allocation6 + $0x10] sm:$0xff] %vm1452, %v1503
    %1512 = vst.msk [vmem:[#allocation6 + $0x18] sm:$0xff] %vm1452, %v1504
    %1513 = vst.msk [vmem:[#allocation6 + $0x20] sm:$0xff] %vm1452, %v1505
    %1514 = vst.msk [vmem:[#allocation6 + $0x28] sm:$0xff] %vm1452, %v1506
    %1515 = vst.msk [vmem:[#allocation6 + $0x30] sm:$0xff] %vm1452, %v1507
    %1516 = vst.msk [vmem:[#allocation6 + $0x38] sm:$0xff] %vm1452, %v1508
    %1525 = vrot.lane.b32.xlu0 %v1372, 8
    %v1526 = vpop.permute.xlu0 %1525
    %1527 = vrot.lane.b32.xlu0 %v1373, 8
    %v1528 = vpop.permute.xlu0 %1527
    %1529 = vrot.lane.b32.xlu0 %v1374, 8
    %v1530 = vpop.permute.xlu0 %1529
    %1531 = vrot.lane.b32.xlu0 %v1375, 8
    %v1532 = vpop.permute.xlu0 %1531
    %1533 = vrot.lane.b32.xlu0 %v1376, 8
    %v1534 = vpop.permute.xlu0 %1533
    %1535 = vrot.lane.b32.xlu0 %v1377, 8
    %v1536 = vpop.permute.xlu0 %1535
    %1537 = vrot.lane.b32.xlu0 %v1378, 8
    %v1538 = vpop.permute.xlu0 %1537
    %1539 = vrot.lane.b32.xlu0 %v1379, 8
    %v1540 = vpop.permute.xlu0 %1539
    %v1549 = vsub.f32 %v1380, %v1526
    %v1550 = vsub.f32 %v1381, %v1528
    %v1551 = vsub.f32 %v1382, %v1530
    %v1552 = vsub.f32 %v1383, %v1532
    %v1553 = vsub.f32 %v1384, %v1534
    %v1554 = vsub.f32 %v1385, %v1536
    %v1555 = vsub.f32 %v1386, %v1538
    %v1556 = vsub.f32 %v1387, %v1540
    %v1557 = vmul.f32 %v1549, 0.5
    %v1558 = vmul.f32 %v1550, 0.5
    %v1559 = vmul.f32 %v1551, 0.5
    %v1560 = vmul.f32 %v1552, 0.5
    %v1561 = vmul.f32 %v1553, 0.5
    %v1562 = vmul.f32 %v1554, 0.5
    %v1563 = vmul.f32 %v1555, 0.5
    %v1564 = vmul.f32 %v1556, 0.5
    %1573 = vrot.lane.b32.xlu0 %v1557, 120
    %v1574 = vpop.permute.xlu0 %1573
    %1575 = vrot.lane.b32.xlu0 %v1558, 120
    %v1576 = vpop.permute.xlu0 %1575
    %1577 = vrot.lane.b32.xlu0 %v1559, 120
    %v1578 = vpop.permute.xlu0 %1577
    %1579 = vrot.lane.b32.xlu0 %v1560, 120
    %v1580 = vpop.permute.xlu0 %1579
    %1581 = vrot.lane.b32.xlu0 %v1561, 120
    %v1582 = vpop.permute.xlu0 %1581
    %1583 = vrot.lane.b32.xlu0 %v1562, 120
    %v1584 = vpop.permute.xlu0 %1583
    %1585 = vrot.lane.b32.xlu0 %v1563, 120
    %v1586 = vpop.permute.xlu0 %1585
    %1587 = vrot.lane.b32.xlu0 %v1564, 120
    %v1588 = vpop.permute.xlu0 %1587
    %1597 = vst.msk [vmem:[#allocation8] sm:$0xff] %vm1452, %v1574
    %1598 = vst.msk [vmem:[#allocation8 + $0x8] sm:$0xff] %vm1452, %v1576
    %1599 = vst.msk [vmem:[#allocation8 + $0x10] sm:$0xff] %vm1452, %v1578
    %1600 = vst.msk [vmem:[#allocation8 + $0x18] sm:$0xff] %vm1452, %v1580
    %1601 = vst.msk [vmem:[#allocation8 + $0x20] sm:$0xff] %vm1452, %v1582
    %1602 = vst.msk [vmem:[#allocation8 + $0x28] sm:$0xff] %vm1452, %v1584
    %1603 = vst.msk [vmem:[#allocation8 + $0x30] sm:$0xff] %vm1452, %v1586
    %1604 = vst.msk [vmem:[#allocation8 + $0x38] sm:$0xff] %vm1452, %v1588
    %1613 = vrot.lane.b32.xlu0 %v1388, 8
    %v1614 = vpop.permute.xlu0 %1613
    %1615 = vrot.lane.b32.xlu0 %v1389, 8
    %v1616 = vpop.permute.xlu0 %1615
    %1617 = vrot.lane.b32.xlu0 %v1390, 8
    %v1618 = vpop.permute.xlu0 %1617
    %1619 = vrot.lane.b32.xlu0 %v1391, 8
    %v1620 = vpop.permute.xlu0 %1619
    %1621 = vrot.lane.b32.xlu0 %v1392, 8
    %v1622 = vpop.permute.xlu0 %1621
    %1623 = vrot.lane.b32.xlu0 %v1393, 8
    %v1624 = vpop.permute.xlu0 %1623
    %1625 = vrot.lane.b32.xlu0 %v1394, 8
    %v1626 = vpop.permute.xlu0 %1625
    %1627 = vrot.lane.b32.xlu0 %v1395, 8
    %v1628 = vpop.permute.xlu0 %1627
    %v1637 = vsub.f32 %v1396, %v1614
    %v1638 = vsub.f32 %v1397, %v1616
    %v1639 = vsub.f32 %v1398, %v1618
    %v1640 = vsub.f32 %v1399, %v1620
    %v1641 = vsub.f32 %v1400, %v1622
    %v1642 = vsub.f32 %v1401, %v1624
    %v1643 = vsub.f32 %v1402, %v1626
    %v1644 = vsub.f32 %v1403, %v1628
    %v1645 = vmul.f32 %v1637, 0.5
    %v1646 = vmul.f32 %v1638, 0.5
    %v1647 = vmul.f32 %v1639, 0.5
    %v1648 = vmul.f32 %v1640, 0.5
    %v1649 = vmul.f32 %v1641, 0.5
    %v1650 = vmul.f32 %v1642, 0.5
    %v1651 = vmul.f32 %v1643, 0.5
    %v1652 = vmul.f32 %v1644, 0.5
    %1661 = vrot.lane.b32.xlu0 %v1645, 120
    %v1662 = vpop.permute.xlu0 %1661
    %1663 = vrot.lane.b32.xlu0 %v1646, 120
    %v1664 = vpop.permute.xlu0 %1663
    %1665 = vrot.lane.b32.xlu0 %v1647, 120
    %v1666 = vpop.permute.xlu0 %1665
    %1667 = vrot.lane.b32.xlu0 %v1648, 120
    %v1668 = vpop.permute.xlu0 %1667
    %1669 = vrot.lane.b32.xlu0 %v1649, 120
    %v1670 = vpop.permute.xlu0 %1669
    %1671 = vrot.lane.b32.xlu0 %v1650, 120
    %v1672 = vpop.permute.xlu0 %1671
    %1673 = vrot.lane.b32.xlu0 %v1651, 120
    %v1674 = vpop.permute.xlu0 %1673
    %1675 = vrot.lane.b32.xlu0 %v1652, 120
    %v1676 = vpop.permute.xlu0 %1675
    %1685 = vst.msk [vmem:[#allocation9] sm:$0xff] %vm1452, %v1662
    %1686 = vst.msk [vmem:[#allocation9 + $0x8] sm:$0xff] %vm1452, %v1664
    %1687 = vst.msk [vmem:[#allocation9 + $0x10] sm:$0xff] %vm1452, %v1666
    %1688 = vst.msk [vmem:[#allocation9 + $0x18] sm:$0xff] %vm1452, %v1668
    %1689 = vst.msk [vmem:[#allocation9 + $0x20] sm:$0xff] %vm1452, %v1670
    %1690 = vst.msk [vmem:[#allocation9 + $0x28] sm:$0xff] %vm1452, %v1672
    %1691 = vst.msk [vmem:[#allocation9 + $0x30] sm:$0xff] %vm1452, %v1674
    %1692 = vst.msk [vmem:[#allocation9 + $0x38] sm:$0xff] %vm1452, %v1676
    // Predicated region
    $region10: #{run.1} parent=1 // pred_check
      _
    $region11: #{run.1} parent=1 // pred_check_branch
      %1694 = sbr.rel (0) target = $region13
    $region12: #{run.1} parent=1 // pred_region
      %s1696 = ssub.s32 1024, 1024
      %1697 = vsyncadd [#allocation4], %s1696
      %s1698 = sshll.u32 [#allocation5], 4
      %s1699 = int_to_ptr.vmem [resolvable:$true] %s1698
      %1704 = dma.vmem_to_hbm [thread:$0]  %s1699, 1024, %s1, [#allocation4], 128, 128, 8
    $region13: #{run.1} parent=1 // pred_fallthru
      _
    // Predicated region
    $region14: #{run.1} parent=1 // pred_check
      _
    $region15: #{run.1} parent=1 // pred_check_branch
      %1706 = sbr.rel (0) target = $region17
    $region16: #{run.1} parent=1 // pred_region
      %s1708 = ssub.s32 1024, 1024
      %1709 = vsyncadd [#allocation7], %s1708
      %s1710 = sshll.u32 [#allocation6], 4
      %s1711 = int_to_ptr.vmem [resolvable:$true] %s1710
      %1716 = dma.vmem_to_hbm [thread:$0]  %s1711, 1024, %s2, [#allocation7], 128, 128, 8
    $region17: #{run.1} parent=1 // pred_fallthru
      _
    // Predicated region
    $region18: #{run.1} parent=1 // pred_check
      _
    $region19: #{run.1} parent=1 // pred_check_branch
      %1718 = sbr.rel (0) target = $region21
    $region20: #{run.1} parent=1 // pred_region
      %s1720 = ssub.s32 1024, 1024
      %1721 = vsyncadd [#allocation7], %s1720
      %s1722 = sshll.u32 [#allocation8], 4
      %s1723 = int_to_ptr.vmem [resolvable:$true] %s1722
      %1728 = dma.vmem_to_hbm [thread:$0]  %s1723, 1024, %s3, [#allocation7], 128, 128, 8
    $region21: #{run.1} parent=1 // pred_fallthru
      _
    // Predicated region
    $region22: #{run.1} parent=1 // pred_check
      _
    $region23: #{run.1} parent=1 // pred_check_branch
      %1730 = sbr.rel (0) target = $region25
    $region24: #{run.1} parent=1 // pred_region
      %s1732 = ssub.s32 1024, 1024
      %1733 = vsyncadd [#allocation10], %s1732
      %s1734 = sshll.u32 [#allocation9], 4
      %s1735 = int_to_ptr.vmem [resolvable:$true] %s1734
      %1740 = dma.vmem_to_hbm [thread:$0]  %s1735, 1024, %s4, [#allocation10], 128, 128, 8
    $region25: #{run.1} parent=1 // pred_fallthru
      _
    // Predicated region
    $region26: #{run.1} parent=1 // pred_check
      _
    $region27: #{run.1} parent=1 // pred_check_branch
      %1742 = sbr.rel (0) target = $region29
    $region28: #{run.1} parent=1 // pred_region
      %1743 = dma.done [#allocation4], 1024
    $region29: #{run.1} parent=1 // pred_fallthru
      _
    // Predicated region
    $region30: #{run.1} parent=1 // pred_check
      _
    $region31: #{run.1} parent=1 // pred_check_branch
      %1745 = sbr.rel (0) target = $region33
    $region32: #{run.1} parent=1 // pred_region
      %1746 = dma.done [#allocation7], 1024
    $region33: #{run.1} parent=1 // pred_fallthru
      _
    // Predicated region
    $region34: #{run.1} parent=1 // pred_check
      _
    $region35: #{run.1} parent=1 // pred_check_branch
      %1748 = sbr.rel (0) target = $region37
    $region36: #{run.1} parent=1 // pred_region
      %1749 = dma.done [#allocation7], 1024
    $region37: #{run.1} parent=1 // pred_fallthru
      _
    // Predicated region
    $region38: #{run.1} parent=1 // pred_check
      _
    $region39: #{run.1} parent=1 // pred_check_branch
      %1751 = sbr.rel (0) target = $region41
    $region40: #{run.1} parent=1 // pred_region
      %1752 = dma.done [#allocation10], 1024
    $region41: #{run.1} parent=1 // pred_fallthru
      _
    %1753 = vsyncpa [#allocation3], 1
    %1754 = vsyncpa [#allocation4], 1
    %1755 = vsyncpa [#allocation7], 1
    %1756 = vsyncpa [#allocation10], 1

// kernel: run.1
$region0: #{run.1}
  #allocation0 [shape = 'u32[]', space=smem, size = 0x4, offset = 0x4, fixed_abs, tag = 'smem constant byte address 0x4 - core index']
  #allocation1 [shape = 'u32[144,128]{1,0:T(1,128)}', space=vmem, size = 0x12000, scoped, tag = 'internal scratch']
  %s0 = inlined_call_operand.vmem [shape: f32[4,8,64], index: 0, kind: input, shape index: {}]
  %s1 = inlined_call_operand.vmem [shape: f32[8,64], index: 1, kind: output, shape index: {0}]
  %s2 = inlined_call_operand.vmem [shape: f32[8,64], index: 2, kind: output, shape index: {1}]
  %s3 = inlined_call_operand.vmem [shape: f32[8,64], index: 3, kind: output, shape index: {2}]
  %s4 = inlined_call_operand.vmem [shape: f32[8,64], index: 4, kind: output, shape index: {3}]
  %5 = xla_tuple %s1, %s2, %s3, %s4
  %s6 = sld [smem:[#allocation0]]
  $region38: #{run.1} parent=0
    _
  %s8 = ssub.s32 1, %s6
  %s9 = scalar_select 0, %s8, %s6
  // Predicated region
  $region2: #{run.1} parent=0 // pred_check
    _
  $region3: #{run.1} parent=0 // pred_check_branch
    %11 = sbr.rel (0) target = $region5
  $region4: #{run.1} parent=0 // pred_region
    _
  $region5: #{run.1} parent=0 // pred_fallthru
    _
  %v12 = vld [vmem:[%s0] sm:$0xff]
  %s13 = scalar_lea.vmem %s0, 8
  %v14 = vld [vmem:[%s13] sm:$0xff]
  %s15 = scalar_lea.vmem %s0, 16
  %v16 = vld [vmem:[%s15] sm:$0xff]
  %s17 = scalar_lea.vmem %s0, 24
  %v18 = vld [vmem:[%s17] sm:$0xff]
  %v19 = vadd.f32 %v12, %v14
  %v20 = vadd.f32 %v16, %v18
  %v21 = vsub.f32 %v14, %v12
  %v22 = vsub.f32 %v18, %v16
  %v23 = vadd.f32 %v19, %v20
  %v24 = vmul.f32 %v23, 0.5
  %vm25 = vcmask 523264
  %26 = vst.msk [vmem:[%s1] sm:$0xff] %vm25, %v24
  %v27 = vadd.f32 %v21, %v22
  %v28 = vmul.f32 %v27, 0.5
  %29 = vst.msk [vmem:[%s2] sm:$0xff] %vm25, %v28
  %v30 = vsub.f32 %v20, %v19
  %v31 = vmul.f32 %v30, 0.5
  %32 = vst.msk [vmem:[%s3] sm:$0xff] %vm25, %v31
  %v33 = vsub.f32 %v22, %v21
  %v34 = vmul.f32 %v33, 0.5
  %35 = vst.msk [vmem:[%s4] sm:$0xff] %vm25, %v34
  // Predicated region
  $region6: #{run.1} parent=0 // pred_check
    _
  $region7: #{run.1} parent=0 // pred_check_branch
    %37 = sbr.rel (0) target = $region9
  $region8: #{run.1} parent=0 // pred_region
    _
  $region9: #{run.1} parent=0 // pred_fallthru
    _
  // Predicated region
  $region10: #{run.1} parent=0 // pred_check
    _
  $region11: #{run.1} parent=0 // pred_check_branch
    %39 = sbr.rel (0) target = $region13
  $region12: #{run.1} parent=0 // pred_region
    _
  $region13: #{run.1} parent=0 // pred_fallthru
    _
  // Predicated region
  $region14: #{run.1} parent=0 // pred_check
    _
  $region15: #{run.1} parent=0 // pred_check_branch
    %41 = sbr.rel (0) target = $region17
  $region16: #{run.1} parent=0 // pred_region
    _
  $region17: #{run.1} parent=0 // pred_fallthru
    _
  // Predicated region
  $region18: #{run.1} parent=0 // pred_check
    _
  $region19: #{run.1} parent=0 // pred_check_branch
    %43 = sbr.rel (0) target = $region21
  $region20: #{run.1} parent=0 // pred_region
    _
  $region21: #{run.1} parent=0 // pred_fallthru
    _
  // Predicated region
  $region22: #{run.1} parent=0 // pred_check
    _
  $region23: #{run.1} parent=0 // pred_check_branch
    %45 = sbr.rel (0) target = $region25
  $region24: #{run.1} parent=0 // pred_region
    _
  $region25: #{run.1} parent=0 // pred_fallthru
    _
  // Predicated region
  $region26: #{run.1} parent=0 // pred_check
    _
  $region27: #{run.1} parent=0 // pred_check_branch
    %47 = sbr.rel (0) target = $region29
  $region28: #{run.1} parent=0 // pred_region
    _
  $region29: #{run.1} parent=0 // pred_fallthru
    _
  // Predicated region
  $region30: #{run.1} parent=0 // pred_check
    _
  $region31: #{run.1} parent=0 // pred_check_branch
    %49 = sbr.rel (0) target = $region33
  $region32: #{run.1} parent=0 // pred_region
    _
  $region33: #{run.1} parent=0 // pred_fallthru
    _
  // Predicated region
  $region34: #{run.1} parent=0 // pred_check
    _
  $region35: #{run.1} parent=0 // pred_check_branch
    %51 = sbr.rel (0) target = $region37
  $region36: #{run.1} parent=0 // pred_region
    _
  $region37: #{run.1} parent=0 // pred_fallthru
    _

</llo_original>
